<compile_context>
chip_gen: v6e
topology: v6e:2x2x1
jax: 0.10.0
libtpu: 0.0.40
codegen_flags: <defaults>
</compile_context>

<pallas_src>
import functools

import jax
import jax.numpy as jnp
from jax.experimental import pallas as pl
from jax.experimental.pallas import tpu as pltpu


# -----------------------------------------------------------------------------
# Pallas kernel: whole batch in one grid step.
#   x_ref : (N, Cin, Lflat)         bf16  flattened, zero-padded NCHW images
#   w_ref : (Cout, KH*KW*Cin)       bf16  per-tap weights with BN scale folded
#   b_ref : (Cout, 1)               f32   folded BN bias
#   o_ref : (N, Cout, Mpad)         f32   Mpad = round_up(Ho*Wp, 128); garbage
#                                         tail lanes/columns dropped by wrapper
# For output flat index q = ho*Wp + wo and tap (kh, kw):
#   x_pad[c, ho+kh, wo+kw] == x_flat[c, q + kh*Wp + kw]
# so each tap is a single static lane-offset slice followed by a
# (Cout, Cin) @ (Cin, Mpad) matmul with a lane-dense RHS.
# -----------------------------------------------------------------------------
def _basic_conv_kernel(x_ref, w_ref, b_ref, o_ref, *, N, KH, KW, Wrow, Cin,
                       Cout, Mpad):
    # Hoisted: bias-initialized accumulator template (one broadcast total).
    acc0 = jnp.broadcast_to(b_ref[...], (Cout, Mpad)).astype(jnp.float32)
    for n in range(N):                                  # N=2: unrolled
        x_bf = x_ref[n]                                 # (Cin, Lflat) bf16
        acc = acc0
        for kh in range(KH):
            for kw in range(KW):
                off = kh * Wrow + kw
                tap = kh * KW + kw
                xs = x_bf[:, off:off + Mpad]            # (Cin, Mpad)  bf16
                w_tap = w_ref[:, tap * Cin:(tap + 1) * Cin]  # (Cout, Cin) bf16
                acc = acc + jnp.dot(w_tap, xs,
                                    preferred_element_type=jnp.float32)
        o_ref[n] = jnp.maximum(acc, 0.0).astype(o_ref.dtype)   # fused ReLU


def basic_conv_forward(x_nchw, weight_oihw, gamma, beta, running_mean,
                       running_var, *, padding=1, eps=1e-5):
    """Conv2d(stride=1, dilation=1, groups=1, bias=False) + BN(eval) + ReLU."""
    N, Cin, H, W = x_nchw.shape
    Cout, Cin_w, KH, KW = weight_oihw.shape
    assert Cin_w == Cin, "groups != 1 not supported"

    p = padding
    Hp, Wp = H + 2 * p, W + 2 * p
    Ho, Wo = Hp - KH + 1, Wp - KW + 1        # stride=1, dilation=1
    Mout = Ho * Wp                           # flat output length (valid part)
    Mpad = ((Mout + 127) // 128) * 128       # lane-dense, unmasked stores

    # Flat padded-image length: every tap's lane slice must stay in bounds.
    max_off = (KH - 1) * Wp + (KW - 1)
    Lflat = ((max(max_off + Mpad, Hp * Wp) + 127) // 128) * 128

    # ---- input prep: zero-pad spatially, flatten H*W (free reshape in HBM),
    # zero-pad the flat tail, and cast the whole image to bf16 once.
    x_pad = jnp.pad(x_nchw, ((0, 0), (0, 0), (p, p), (p, p)))
    x_flat = x_pad.reshape(N, Cin, Hp * Wp)
    x_flat = jnp.pad(x_flat, ((0, 0), (0, 0), (0, Lflat - Hp * Wp)))
    x_flat = x_flat.astype(jnp.bfloat16)

    # ---- fold BatchNorm into the conv: w' = w * scale, b' = beta - mean*scale.
    inv_std = jax.lax.rsqrt(running_var.astype(jnp.float32) + eps)
    scale = gamma.astype(jnp.float32) * inv_std                     # (Cout,)
    bias = beta.astype(jnp.float32) - running_mean.astype(jnp.float32) * scale
    w_scaled = weight_oihw.astype(jnp.float32) * scale[:, None, None, None]
    # (Cout, Cin, KH, KW) -> one 2-D bf16 slab (Cout, KH*KW*Cin), tap-major.
    w_slab = jnp.transpose(w_scaled, (0, 2, 3, 1)).reshape(Cout, KH * KW * Cin)
    w_slab = w_slab.astype(jnp.bfloat16)
    bias2d = bias.reshape(Cout, 1)

    kernel = functools.partial(_basic_conv_kernel, N=N, KH=KH, KW=KW, Wrow=Wp,
                               Cin=Cin, Cout=Cout, Mpad=Mpad)

    flops = 2 * N * Mpad * KH * KW * Cin * Cout   # what the kernel computes
    bytes_accessed = (x_flat.size * 2 + w_slab.size * 2 + bias2d.size * 4
                      + N * Cout * Mpad * 4)

    out_flat = pl.pallas_call(
        kernel,
        out_shape=jax.ShapeDtypeStruct((N, Cout, Mpad), jnp.float32),
        grid_spec=pltpu.PrefetchScalarGridSpec(
            num_scalar_prefetch=0,
            grid=(1,),                              # single step: no per-image
            in_specs=[                              # grid overhead on v5e/v6e
                pl.BlockSpec((N, Cin, Lflat), lambda i: (0, 0, 0)),
                pl.BlockSpec((Cout, KH * KW * Cin), lambda i: (0, 0)),
                pl.BlockSpec((Cout, 1), lambda i: (0, 0)),
            ],
            out_specs=pl.BlockSpec((N, Cout, Mpad), lambda i: (0, 0, 0)),
        ),
        compiler_params=pltpu.CompilerParams(
            dimension_semantics=("arbitrary",),
            vmem_limit_bytes=32 * 1024 * 1024,
        ),
        cost_estimate=pl.CostEstimate(flops=flops, transcendentals=0,
                                      bytes_accessed=bytes_accessed),
    )(x_flat, w_slab, bias2d)

    # (N, Cout, Mpad) -> drop pad lanes -> (N, Cout, Ho, Wp) -> drop the KW-1
    # wrap-around columns per row.  All free metadata ops / slices in HBM.
    out = out_flat[:, :, :Mout].reshape(N, Cout, Ho, Wp)[:, :, :, :Wo]
    return out


# -----------------------------------------------------------------------------
# Pure-JAX reference (same math) for correctness checks.
# -----------------------------------------------------------------------------
def basic_conv_ref(x_nchw, weight_oihw, gamma, beta, running_mean, running_var,
                   *, padding=1, eps=1e-5, quantize_bf16=False):
    inv_std = jax.lax.rsqrt(running_var + eps)
    scale = gamma * inv_std
    bias = beta - running_mean * scale
    x = x_nchw
    w = weight_oihw * scale[:, None, None, None]
    if quantize_bf16:   # mirror the kernel's bf16 operand quantization
        x = x.astype(jnp.bfloat16).astype(jnp.float32)
        w = w.astype(jnp.bfloat16).astype(jnp.float32)
    y = jax.lax.conv_general_dilated(
        x, w, window_strides=(1, 1),
        padding=[(padding, padding), (padding, padding)],
        dimension_numbers=("NCHW", "OIHW", "NCHW"))
    return jnp.maximum(y + bias[None, :, None, None], 0.0)


if __name__ == "__main__":
    # BasicConv(in_planes=4, out_planes=8, kernel_size=3, padding=1)
    N, Cin, H, W = 2, 4, 16, 16
    Cout, KH, KW = 8, 3, 3

    key = jax.random.PRNGKey(0)
    kx, kw, kg, kb, km, kv = jax.random.split(key, 6)

    x = jax.random.normal(kx, (N, Cin, H, W), dtype=jnp.float32)
    weight = jax.random.normal(kw, (Cout, Cin, KH, KW), dtype=jnp.float32) * 0.1
    gamma = 1.0 + 0.1 * jax.random.normal(kg, (Cout,), dtype=jnp.float32)
    beta = 0.1 * jax.random.normal(kb, (Cout,), dtype=jnp.float32)
    running_mean = 0.1 * jax.random.normal(km, (Cout,), dtype=jnp.float32)
    running_var = jnp.abs(1.0 + 0.1 * jax.random.normal(kv, (Cout,),
                                                        dtype=jnp.float32))

    out = basic_conv_forward(x, weight, gamma, beta, running_mean, running_var,
                             padding=1)
    out = jax.block_until_ready(out)
    assert out.shape == (N, Cout, H, W)

    # Tight check against a reference using the same bf16-quantized operands.
    ref_q = basic_conv_ref(x, weight, gamma, beta, running_mean, running_var,
                           padding=1, quantize_bf16=True)
    assert jnp.allclose(out, ref_q, rtol=2e-3, atol=2e-3), \
        "mismatch vs bf16-quantized reference"

    # Loose sanity check against the full-precision reference.
    ref_f = basic_conv_ref(x, weight, gamma, beta, running_mean, running_var,
                           padding=1, quantize_bf16=False)
    assert jnp.allclose(out, ref_f, rtol=1e-1, atol=1e-1), \
        "mismatch vs f32 reference"

    print("KERNEL_OK")
</pallas_src>

<mosaic_0001>
module attributes {stable_mosaic.version = 11 : i64} {
  func.func @_basic_conv_kernel(%arg0: i32, %arg1: memref<2x4x512xbf16, #tpu.memory_space<vmem>>, %arg2: memref<8x36xbf16, #tpu.memory_space<vmem>>, %arg3: memref<8x1xf32, #tpu.memory_space<vmem>>, %arg4: memref<2x8x384xf32, #tpu.memory_space<vmem>>) attributes {dimension_semantics = [#tpu.dimension_semantics<arbitrary>], iteration_bounds = array<i64: 1>, scalar_prefetch = 0 : i64, scratch_operands = 0 : i64, tpu.core_type = #tpu.core_type<tc>, window_params = [{pipeline_mode = #tpu.pipeline_mode<synchronous>, transform_indices = @transform_0, window_bounds = array<i64: 2, 4, 512>}, {pipeline_mode = #tpu.pipeline_mode<synchronous>, transform_indices = @transform_1, window_bounds = array<i64: 8, 36>}, {pipeline_mode = #tpu.pipeline_mode<synchronous>, transform_indices = @transform_2, window_bounds = array<i64: 8, 1>}, {pipeline_mode = #tpu.pipeline_mode<synchronous>, transform_indices = @transform_3, window_bounds = array<i64: 2, 8, 384>}]} {
    %c0 = arith.constant 0 : index
    %c0_0 = arith.constant 0 : index
    %0 = vector.load %arg3[%c0, %c0_0] : memref<8x1xf32, #tpu.memory_space<vmem>>, vector<8x1xf32>
    %1 = vector.shape_cast %0 : vector<8x1xf32> to vector<8x1xf32>
    %2 = vector.broadcast %1 : vector<8x1xf32> to vector<8x384xf32>
    %c0_1 = arith.constant 0 : index
    %c0_2 = arith.constant 0 : index
    %c0_3 = arith.constant 0 : index
    %3 = vector.load %arg1[%c0_1, %c0_2, %c0_3] : memref<2x4x512xbf16, #tpu.memory_space<vmem>>, vector<1x4x512xbf16>
    %4 = vector.shape_cast %3 : vector<1x4x512xbf16> to vector<4x512xbf16>
    %5 = vector.extract_strided_slice %4 {offsets = [0, 0], sizes = [4, 384], strides = [1, 1]} : vector<4x512xbf16> to vector<4x384xbf16>
    %c0_4 = arith.constant 0 : index
    %c0_5 = arith.constant 0 : index
    %6 = vector.load %arg2[%c0_4, %c0_5] : memref<8x36xbf16, #tpu.memory_space<vmem>>, vector<8x4xbf16>
    %cst = arith.constant dense<0.000000e+00> : vector<8x384xf32>
    %7 = tpu.matmul %6, %5, %cst {dimension_numbers = #tpu.dot_dimension_numbers<[1], [0], [0], [1], [0, 0, 1, 1], [], []>} : vector<8x4xbf16>, vector<4x384xbf16>, vector<8x384xf32> -> vector<8x384xf32>
    %8 = arith.addf %2, %7 : vector<8x384xf32>
    %9 = vector.extract_strided_slice %4 {offsets = [0, 1], sizes = [4, 384], strides = [1, 1]} : vector<4x512xbf16> to vector<4x384xbf16>
    %c0_6 = arith.constant 0 : index
    %c4 = arith.constant 4 : index
    %10 = vector.load %arg2[%c0_6, %c4] : memref<8x36xbf16, #tpu.memory_space<vmem>>, vector<8x4xbf16>
    %cst_7 = arith.constant dense<0.000000e+00> : vector<8x384xf32>
    %11 = tpu.matmul %10, %9, %cst_7 {dimension_numbers = #tpu.dot_dimension_numbers<[1], [0], [0], [1], [0, 0, 1, 1], [], []>} : vector<8x4xbf16>, vector<4x384xbf16>, vector<8x384xf32> -> vector<8x384xf32>
    %12 = arith.addf %8, %11 : vector<8x384xf32>
    %13 = vector.extract_strided_slice %4 {offsets = [0, 2], sizes = [4, 384], strides = [1, 1]} : vector<4x512xbf16> to vector<4x384xbf16>
    %c0_8 = arith.constant 0 : index
    %c8 = arith.constant 8 : index
    %14 = vector.load %arg2[%c0_8, %c8] : memref<8x36xbf16, #tpu.memory_space<vmem>>, vector<8x4xbf16>
    %cst_9 = arith.constant dense<0.000000e+00> : vector<8x384xf32>
    %15 = tpu.matmul %14, %13, %cst_9 {dimension_numbers = #tpu.dot_dimension_numbers<[1], [0], [0], [1], [0, 0, 1, 1], [], []>} : vector<8x4xbf16>, vector<4x384xbf16>, vector<8x384xf32> -> vector<8x384xf32>
    %16 = arith.addf %12, %15 : vector<8x384xf32>
    %17 = vector.extract_strided_slice %4 {offsets = [0, 18], sizes = [4, 384], strides = [1, 1]} : vector<4x512xbf16> to vector<4x384xbf16>
    %c0_10 = arith.constant 0 : index
    %c12 = arith.constant 12 : index
    %18 = vector.load %arg2[%c0_10, %c12] : memref<8x36xbf16, #tpu.memory_space<vmem>>, vector<8x4xbf16>
    %cst_11 = arith.constant dense<0.000000e+00> : vector<8x384xf32>
    %19 = tpu.matmul %18, %17, %cst_11 {dimension_numbers = #tpu.dot_dimension_numbers<[1], [0], [0], [1], [0, 0, 1, 1], [], []>} : vector<8x4xbf16>, vector<4x384xbf16>, vector<8x384xf32> -> vector<8x384xf32>
    %20 = arith.addf %16, %19 : vector<8x384xf32>
    %21 = vector.extract_strided_slice %4 {offsets = [0, 19], sizes = [4, 384], strides = [1, 1]} : vector<4x512xbf16> to vector<4x384xbf16>
    %c0_12 = arith.constant 0 : index
    %c16 = arith.constant 16 : index
    %22 = vector.load %arg2[%c0_12, %c16] : memref<8x36xbf16, #tpu.memory_space<vmem>>, vector<8x4xbf16>
    %cst_13 = arith.constant dense<0.000000e+00> : vector<8x384xf32>
    %23 = tpu.matmul %22, %21, %cst_13 {dimension_numbers = #tpu.dot_dimension_numbers<[1], [0], [0], [1], [0, 0, 1, 1], [], []>} : vector<8x4xbf16>, vector<4x384xbf16>, vector<8x384xf32> -> vector<8x384xf32>
    %24 = arith.addf %20, %23 : vector<8x384xf32>
    %25 = vector.extract_strided_slice %4 {offsets = [0, 20], sizes = [4, 384], strides = [1, 1]} : vector<4x512xbf16> to vector<4x384xbf16>
    %c0_14 = arith.constant 0 : index
    %c20 = arith.constant 20 : index
    %26 = vector.load %arg2[%c0_14, %c20] : memref<8x36xbf16, #tpu.memory_space<vmem>>, vector<8x4xbf16>
    %cst_15 = arith.constant dense<0.000000e+00> : vector<8x384xf32>
    %27 = tpu.matmul %26, %25, %cst_15 {dimension_numbers = #tpu.dot_dimension_numbers<[1], [0], [0], [1], [0, 0, 1, 1], [], []>} : vector<8x4xbf16>, vector<4x384xbf16>, vector<8x384xf32> -> vector<8x384xf32>
    %28 = arith.addf %24, %27 : vector<8x384xf32>
    %29 = vector.extract_strided_slice %4 {offsets = [0, 36], sizes = [4, 384], strides = [1, 1]} : vector<4x512xbf16> to vector<4x384xbf16>
    %c0_16 = arith.constant 0 : index
    %c24 = arith.constant 24 : index
    %30 = vector.load %arg2[%c0_16, %c24] : memref<8x36xbf16, #tpu.memory_space<vmem>>, vector<8x4xbf16>
    %cst_17 = arith.constant dense<0.000000e+00> : vector<8x384xf32>
    %31 = tpu.matmul %30, %29, %cst_17 {dimension_numbers = #tpu.dot_dimension_numbers<[1], [0], [0], [1], [0, 0, 1, 1], [], []>} : vector<8x4xbf16>, vector<4x384xbf16>, vector<8x384xf32> -> vector<8x384xf32>
    %32 = arith.addf %28, %31 : vector<8x384xf32>
    %33 = vector.extract_strided_slice %4 {offsets = [0, 37], sizes = [4, 384], strides = [1, 1]} : vector<4x512xbf16> to vector<4x384xbf16>
    %c0_18 = arith.constant 0 : index
    %c28 = arith.constant 28 : index
    %34 = vector.load %arg2[%c0_18, %c28] : memref<8x36xbf16, #tpu.memory_space<vmem>>, vector<8x4xbf16>
    %cst_19 = arith.constant dense<0.000000e+00> : vector<8x384xf32>
    %35 = tpu.matmul %34, %33, %cst_19 {dimension_numbers = #tpu.dot_dimension_numbers<[1], [0], [0], [1], [0, 0, 1, 1], [], []>} : vector<8x4xbf16>, vector<4x384xbf16>, vector<8x384xf32> -> vector<8x384xf32>
    %36 = arith.addf %32, %35 : vector<8x384xf32>
    %37 = vector.extract_strided_slice %4 {offsets = [0, 38], sizes = [4, 384], strides = [1, 1]} : vector<4x512xbf16> to vector<4x384xbf16>
    %c0_20 = arith.constant 0 : index
    %c32 = arith.constant 32 : index
    %38 = vector.load %arg2[%c0_20, %c32] : memref<8x36xbf16, #tpu.memory_space<vmem>>, vector<8x4xbf16>
    %cst_21 = arith.constant dense<0.000000e+00> : vector<8x384xf32>
    %39 = tpu.matmul %38, %37, %cst_21 {dimension_numbers = #tpu.dot_dimension_numbers<[1], [0], [0], [1], [0, 0, 1, 1], [], []>} : vector<8x4xbf16>, vector<4x384xbf16>, vector<8x384xf32> -> vector<8x384xf32>
    %40 = arith.addf %36, %39 : vector<8x384xf32>
    %cst_22 = arith.constant 0.000000e+00 : f32
    %41 = vector.broadcast %cst_22 : f32 to vector<8x384xf32>
    %42 = arith.maximumf %40, %41 : vector<8x384xf32>
    %c0_23 = arith.constant 0 : index
    %c0_24 = arith.constant 0 : index
    %c0_25 = arith.constant 0 : index
    %43 = vector.load %arg4[%c0_23, %c0_24, %c0_25] : memref<2x8x384xf32, #tpu.memory_space<vmem>>, vector<1x8x384xf32>
    %44 = vector.shape_cast %43 : vector<1x8x384xf32> to vector<8x384xf32>
    %45 = vector.shape_cast %42 : vector<8x384xf32> to vector<1x8x384xf32>
    tpu.vector_store %arg4[%c0_23, %c0_24, %c0_25], %45 {strides = array<i32>} : memref<2x8x384xf32, #tpu.memory_space<vmem>>, vector<1x8x384xf32>,
    %c1 = arith.constant 1 : index
    %c0_26 = arith.constant 0 : index
    %c0_27 = arith.constant 0 : index
    %46 = vector.load %arg1[%c1, %c0_26, %c0_27] : memref<2x4x512xbf16, #tpu.memory_space<vmem>>, vector<1x4x512xbf16>
    %47 = vector.shape_cast %46 : vector<1x4x512xbf16> to vector<4x512xbf16>
    %48 = vector.extract_strided_slice %47 {offsets = [0, 0], sizes = [4, 384], strides = [1, 1]} : vector<4x512xbf16> to vector<4x384xbf16>
    %c0_28 = arith.constant 0 : index
    %c0_29 = arith.constant 0 : index
    %49 = vector.load %arg2[%c0_28, %c0_29] : memref<8x36xbf16, #tpu.memory_space<vmem>>, vector<8x4xbf16>
    %cst_30 = arith.constant dense<0.000000e+00> : vector<8x384xf32>
    %50 = tpu.matmul %49, %48, %cst_30 {dimension_numbers = #tpu.dot_dimension_numbers<[1], [0], [0], [1], [0, 0, 1, 1], [], []>} : vector<8x4xbf16>, vector<4x384xbf16>, vector<8x384xf32> -> vector<8x384xf32>
    %51 = arith.addf %2, %50 : vector<8x384xf32>
    %52 = vector.extract_strided_slice %47 {offsets = [0, 1], sizes = [4, 384], strides = [1, 1]} : vector<4x512xbf16> to vector<4x384xbf16>
    %c0_31 = arith.constant 0 : index
    %c4_32 = arith.constant 4 : index
    %53 = vector.load %arg2[%c0_31, %c4_32] : memref<8x36xbf16, #tpu.memory_space<vmem>>, vector<8x4xbf16>
    %cst_33 = arith.constant dense<0.000000e+00> : vector<8x384xf32>
    %54 = tpu.matmul %53, %52, %cst_33 {dimension_numbers = #tpu.dot_dimension_numbers<[1], [0], [0], [1], [0, 0, 1, 1], [], []>} : vector<8x4xbf16>, vector<4x384xbf16>, vector<8x384xf32> -> vector<8x384xf32>
    %55 = arith.addf %51, %54 : vector<8x384xf32>
    %56 = vector.extract_strided_slice %47 {offsets = [0, 2], sizes = [4, 384], strides = [1, 1]} : vector<4x512xbf16> to vector<4x384xbf16>
    %c0_34 = arith.constant 0 : index
    %c8_35 = arith.constant 8 : index
    %57 = vector.load %arg2[%c0_34, %c8_35] : memref<8x36xbf16, #tpu.memory_space<vmem>>, vector<8x4xbf16>
    %cst_36 = arith.constant dense<0.000000e+00> : vector<8x384xf32>
    %58 = tpu.matmul %57, %56, %cst_36 {dimension_numbers = #tpu.dot_dimension_numbers<[1], [0], [0], [1], [0, 0, 1, 1], [], []>} : vector<8x4xbf16>, vector<4x384xbf16>, vector<8x384xf32> -> vector<8x384xf32>
    %59 = arith.addf %55, %58 : vector<8x384xf32>
    %60 = vector.extract_strided_slice %47 {offsets = [0, 18], sizes = [4, 384], strides = [1, 1]} : vector<4x512xbf16> to vector<4x384xbf16>
    %c0_37 = arith.constant 0 : index
    %c12_38 = arith.constant 12 : index
    %61 = vector.load %arg2[%c0_37, %c12_38] : memref<8x36xbf16, #tpu.memory_space<vmem>>, vector<8x4xbf16>
    %cst_39 = arith.constant dense<0.000000e+00> : vector<8x384xf32>
    %62 = tpu.matmul %61, %60, %cst_39 {dimension_numbers = #tpu.dot_dimension_numbers<[1], [0], [0], [1], [0, 0, 1, 1], [], []>} : vector<8x4xbf16>, vector<4x384xbf16>, vector<8x384xf32> -> vector<8x384xf32>
    %63 = arith.addf %59, %62 : vector<8x384xf32>
    %64 = vector.extract_strided_slice %47 {offsets = [0, 19], sizes = [4, 384], strides = [1, 1]} : vector<4x512xbf16> to vector<4x384xbf16>
    %c0_40 = arith.constant 0 : index
    %c16_41 = arith.constant 16 : index
    %65 = vector.load %arg2[%c0_40, %c16_41] : memref<8x36xbf16, #tpu.memory_space<vmem>>, vector<8x4xbf16>
    %cst_42 = arith.constant dense<0.000000e+00> : vector<8x384xf32>
    %66 = tpu.matmul %65, %64, %cst_42 {dimension_numbers = #tpu.dot_dimension_numbers<[1], [0], [0], [1], [0, 0, 1, 1], [], []>} : vector<8x4xbf16>, vector<4x384xbf16>, vector<8x384xf32> -> vector<8x384xf32>
    %67 = arith.addf %63, %66 : vector<8x384xf32>
    %68 = vector.extract_strided_slice %47 {offsets = [0, 20], sizes = [4, 384], strides = [1, 1]} : vector<4x512xbf16> to vector<4x384xbf16>
    %c0_43 = arith.constant 0 : index
    %c20_44 = arith.constant 20 : index
    %69 = vector.load %arg2[%c0_43, %c20_44] : memref<8x36xbf16, #tpu.memory_space<vmem>>, vector<8x4xbf16>
    %cst_45 = arith.constant dense<0.000000e+00> : vector<8x384xf32>
    %70 = tpu.matmul %69, %68, %cst_45 {dimension_numbers = #tpu.dot_dimension_numbers<[1], [0], [0], [1], [0, 0, 1, 1], [], []>} : vector<8x4xbf16>, vector<4x384xbf16>, vector<8x384xf32> -> vector<8x384xf32>
    %71 = arith.addf %67, %70 : vector<8x384xf32>
    %72 = vector.extract_strided_slice %47 {offsets = [0, 36], sizes = [4, 384], strides = [1, 1]} : vector<4x512xbf16> to vector<4x384xbf16>
    %c0_46 = arith.constant 0 : index
    %c24_47 = arith.constant 24 : index
    %73 = vector.load %arg2[%c0_46, %c24_47] : memref<8x36xbf16, #tpu.memory_space<vmem>>, vector<8x4xbf16>
    %cst_48 = arith.constant dense<0.000000e+00> : vector<8x384xf32>
    %74 = tpu.matmul %73, %72, %cst_48 {dimension_numbers = #tpu.dot_dimension_numbers<[1], [0], [0], [1], [0, 0, 1, 1], [], []>} : vector<8x4xbf16>, vector<4x384xbf16>, vector<8x384xf32> -> vector<8x384xf32>
    %75 = arith.addf %71, %74 : vector<8x384xf32>
    %76 = vector.extract_strided_slice %47 {offsets = [0, 37], sizes = [4, 384], strides = [1, 1]} : vector<4x512xbf16> to vector<4x384xbf16>
    %c0_49 = arith.constant 0 : index
    %c28_50 = arith.constant 28 : index
    %77 = vector.load %arg2[%c0_49, %c28_50] : memref<8x36xbf16, #tpu.memory_space<vmem>>, vector<8x4xbf16>
    %cst_51 = arith.constant dense<0.000000e+00> : vector<8x384xf32>
    %78 = tpu.matmul %77, %76, %cst_51 {dimension_numbers = #tpu.dot_dimension_numbers<[1], [0], [0], [1], [0, 0, 1, 1], [], []>} : vector<8x4xbf16>, vector<4x384xbf16>, vector<8x384xf32> -> vector<8x384xf32>
    %79 = arith.addf %75, %78 : vector<8x384xf32>
    %80 = vector.extract_strided_slice %47 {offsets = [0, 38], sizes = [4, 384], strides = [1, 1]} : vector<4x512xbf16> to vector<4x384xbf16>
    %c0_52 = arith.constant 0 : index
    %c32_53 = arith.constant 32 : index
    %81 = vector.load %arg2[%c0_52, %c32_53] : memref<8x36xbf16, #tpu.memory_space<vmem>>, vector<8x4xbf16>
    %cst_54 = arith.constant dense<0.000000e+00> : vector<8x384xf32>
    %82 = tpu.matmul %81, %80, %cst_54 {dimension_numbers = #tpu.dot_dimension_numbers<[1], [0], [0], [1], [0, 0, 1, 1], [], []>} : vector<8x4xbf16>, vector<4x384xbf16>, vector<8x384xf32> -> vector<8x384xf32>
    %83 = arith.addf %79, %82 : vector<8x384xf32>
    %cst_55 = arith.constant 0.000000e+00 : f32
    %84 = vector.broadcast %cst_55 : f32 to vector<8x384xf32>
    %85 = arith.maximumf %83, %84 : vector<8x384xf32>
    %c1_56 = arith.constant 1 : index
    %c0_57 = arith.constant 0 : index
    %c0_58 = arith.constant 0 : index
    %86 = vector.load %arg4[%c1_56, %c0_57, %c0_58] : memref<2x8x384xf32, #tpu.memory_space<vmem>>, vector<1x8x384xf32>
    %87 = vector.shape_cast %86 : vector<1x8x384xf32> to vector<8x384xf32>
    %88 = vector.shape_cast %85 : vector<8x384xf32> to vector<1x8x384xf32>
    tpu.vector_store %arg4[%c1_56, %c0_57, %c0_58], %88 {strides = array<i32>} : memref<2x8x384xf32, #tpu.memory_space<vmem>>, vector<1x8x384xf32>,
    return
  }
  func.func @transform_0(%arg0: i32) -> (i32, i32, i32) {
    %c0_i32 = arith.constant 0 : i32
    %c0_i32_0 = arith.constant 0 : i32
    %c0_i32_1 = arith.constant 0 : i32
    %c0_i32_2 = arith.constant 0 : i32
    return %c0_i32, %c0_i32_0, %c0_i32_1 : i32, i32, i32
  }
  func.func @transform_1(%arg0: i32) -> (i32, i32) {
    %c0_i32 = arith.constant 0 : i32
    %c0_i32_0 = arith.constant 0 : i32
    %c0_i32_1 = arith.constant 0 : i32
    return %c0_i32, %c0_i32_0 : i32, i32
  }
  func.func @transform_2(%arg0: i32) -> (i32, i32) {
    %c0_i32 = arith.constant 0 : i32
    %c0_i32_0 = arith.constant 0 : i32
    %c0_i32_1 = arith.constant 0 : i32
    return %c0_i32, %c0_i32_0 : i32, i32
  }
  func.func @transform_3(%arg0: i32) -> (i32, i32, i32) {
    %c0_i32 = arith.constant 0 : i32
    %c0_i32_0 = arith.constant 0 : i32
    %c0_i32_1 = arith.constant 0 : i32
    %c0_i32_2 = arith.constant 0 : i32
    return %c0_i32, %c0_i32_0, %c0_i32_1 : i32, i32, i32
  }
}

</mosaic_0001>

<llo_original>
// kernel: tpu_custom_call.1
$region0: #{tpu_custom_call.1}
  #allocation0 [shape = 'u32[]', space=smem, size = 0x4, offset = 0x4, fixed_abs, tag = 'smem constant byte address 0x4 - core index']
  #allocation1 [shape = 'u32[144,128]{1,0:T(1,128)}', space=vmem, size = 0x12000, scoped, tag = 'internal scratch']
  %s0 = inlined_call_operand.hbm [shape: bf16[2,4,512], index: 0, kind: input, shape index: {}]
  %s1 = inlined_call_operand.vmem [shape: bf16[8,36], index: 1, kind: input, shape index: {}]
  %s2 = inlined_call_operand.vmem [shape: f32[8,1], index: 2, kind: input, shape index: {}]
  %s3 = inlined_call_operand.hbm [shape: f32[2,8,384], index: 3, kind: output, shape index: {}]
  %s4 = sld [smem:[#allocation0]]
  $region26: #{tpu_custom_call.1} parent=0
    _
  %s6 = ssub.s32 1, %s4
  %s7 = scalar_select 0, %s6, %s4
  $region1: #{tpu_custom_call.1} parent=0
    #allocation2 [shape = 'u8[8192]{0}', space=vmem, size = 0x2000, scoped, tag = 'input window, operand 0, single buffered']
    #allocation3 [shape = 's32[1]{0}', space=sflag, size = 0x4, scoped, tag = 'scoped memory for tpu_custom_call.1']
    #allocation4 [shape = 's32[1]{0}', space=sflag, size = 0x4, scoped, tag = 'scoped memory for tpu_custom_call.1']
    #allocation5 [shape = 'u8[24576]{0}', space=vmem, size = 0x6000, scoped, tag = 'output window, operand 0, single buffered']
    %8 = vsyncpa [#allocation3], 0
    %9 = vsyncpa [#allocation4], 0
    // Predicated region
    $region2: #{tpu_custom_call.1} parent=1 // pred_check
      _
    $region3: #{tpu_custom_call.1} parent=1 // pred_check_branch
      %11 = sbr.rel (0) target = $region5
    $region4: #{tpu_custom_call.1} parent=1 // pred_region
      %s13 = ssub.s32 256, 256
      %14 = vsyncadd [#allocation3], %s13
      %s15 = sshll.u32 [#allocation2], 4
      %s16 = int_to_ptr.vmem [resolvable:$true] %s15
      %21 = dma.hbm_to_vmem [thread:$0]  %s0, 256, %s16, [#allocation3], 128, 128, 8
    $region5: #{tpu_custom_call.1} parent=1 // pred_fallthru
      _
    // Predicated region
    $region6: #{tpu_custom_call.1} parent=1 // pred_check
      _
    $region7: #{tpu_custom_call.1} parent=1 // pred_check_branch
      %23 = sbr.rel (0) target = $region9
    $region8: #{tpu_custom_call.1} parent=1 // pred_region
      _
    $region9: #{tpu_custom_call.1} parent=1 // pred_fallthru
      _
    // Predicated region
    $region10: #{tpu_custom_call.1} parent=1 // pred_check
      _
    $region11: #{tpu_custom_call.1} parent=1 // pred_check_branch
      %25 = sbr.rel (0) target = $region13
    $region12: #{tpu_custom_call.1} parent=1 // pred_region
      _
    $region13: #{tpu_custom_call.1} parent=1 // pred_fallthru
      _
    // Predicated region
    $region14: #{tpu_custom_call.1} parent=1 // pred_check
      _
    $region15: #{tpu_custom_call.1} parent=1 // pred_check_branch
      %27 = sbr.rel (0) target = $region17
    $region16: #{tpu_custom_call.1} parent=1 // pred_region
      %28 = dma.done [#allocation3], 256
    $region17: #{tpu_custom_call.1} parent=1 // pred_fallthru
      _
    %v30 = vld [vmem:[%s2] sm:$0xff]
    %32 = vset.pattern.permute.xlu0 0
    %33 = vperm.xlu0 %32, %v30
    %v34 = vpop.permute.xlu0 %33
    %v36 = vld [vmem:[#allocation2] sm:$0xff]
    %v37 = vld [vmem:[%s1] sm:$0xf]
    %v39 = vcombine.high %v36, %v36
    %v41 = vunpack.c.l.s4 1983009808
    %v42 = vunpack.c.0.s8 %v41
    %v43 = vlaneseq
    %v44 = vshrl.u32 %v43, 7
    %v45 = vsub.s32 %v42, %v44
    %v46 = vrot.slane %v36, %v45
    %v48 = vunpack.c.l.s4 1983009808
    %v49 = vunpack.c.0.s8 %v48
    %v50 = vlaneseq
    %v51 = vshrl.u32 %v50, 7
    %v52 = vsub.s32 %v49, %v51
    %v53 = vrot.slane %v39, %v52
    %v54 = vcombine.high %v46, %v46
    %vm55 = vcmask 31744
    %v57 = vsel %vm55, %v37, 0
    %vm59 = vcmask 1041408
    %v61 = vsel %vm59, %v46, 0
    %v64 = vsel %vm59, %v54, 0
    %v67 = vsel %vm59, %v53, 0
    %69 = vmatprep.subr.bf16.mxu0 0
    %70 = vmatpush1.bf16.msra.mxu0 0
    %71 = vmatprep.subr.bf16.mxu0 0
    %72 = vmatpush1.bf16.msra.mxu0 0
    %73 = vmatprep.subr.bf16.mxu0 0
    %74 = vmatpush1.bf16.msra.mxu0 0
    %75 = vmatprep.subr.bf16.mxu0 0
    %76 = vmatpush1.bf16.msra.mxu0 0
    %77 = vmatprep.subr.bf16.mxu0 0
    %78 = vmatpush1.bf16.msra.mxu0 0
    %79 = vmatprep.subr.bf16.mxu0 0
    %80 = vmatpush1.bf16.msra.mxu0 0
    %81 = vmatprep.subr.bf16.mxu0 0
    %82 = vmatpush1.bf16.msra.mxu0 0
    %83 = vmatprep.subr.bf16.mxu0 %v64
    %84 = vmatpush1.bf16.msra.mxu0 %v61
    %85 = vmatprep.subr.bf16.mxu0 0
    %86 = vmatpush2.bf16.msra.mxu0 0
    %87 = vmatprep.subr.bf16.mxu0 0
    %88 = vmatpush2.bf16.msra.mxu0 0
    %89 = vmatprep.subr.bf16.mxu0 0
    %90 = vmatpush2.bf16.msra.mxu0 0
    %91 = vmatprep.subr.bf16.mxu0 0
    %92 = vmatpush2.bf16.msra.mxu0 0
    %93 = vmatprep.subr.bf16.mxu0 0
    %94 = vmatpush2.bf16.msra.mxu0 0
    %95 = vmatprep.subr.bf16.mxu0 0
    %96 = vmatpush2.bf16.msra.mxu0 0
    %97 = vmatprep.subr.bf16.mxu0 0
    %98 = vmatpush2.bf16.msra.mxu0 0
    %99 = vmatprep.subr.bf16.mxu0 0
    %100 = vmatpush2.bf16.msra.mxu0 0
    %101 = vmatprep.mubr.bf16.mxu0 0
    %102 = vmatmul.mubr.bf16.gmra.mxu0 %v57
    %v103 = vpop.f32.mrf.mxu0
    %v104 = vadd.f32 0.0, %v103
    %v105 = vpop.f32.mrf.mxu0
    %v106 = vadd.f32 0.0, %v105
    %v107 = vpop.f32.mrf.mxu0
    %v108 = vpop.f32.mrf.mxu0
    %109 = vdwg.mxu0
    %110 = vmatprep.subr.bf16.mxu0 0
    %111 = vmatpush1.bf16.msra.mxu0 0
    %112 = vmatprep.subr.bf16.mxu0 0
    %113 = vmatpush1.bf16.msra.mxu0 0
    %114 = vmatprep.subr.bf16.mxu0 0
    %115 = vmatpush1.bf16.msra.mxu0 0
    %116 = vmatprep.subr.bf16.mxu0 0
    %117 = vmatpush1.bf16.msra.mxu0 0
    %118 = vmatprep.subr.bf16.mxu0 0
    %119 = vmatpush1.bf16.msra.mxu0 0
    %120 = vmatprep.subr.bf16.mxu0 0
    %121 = vmatpush1.bf16.msra.mxu0 0
    %122 = vmatprep.subr.bf16.mxu0 0
    %123 = vmatpush1.bf16.msra.mxu0 0
    %124 = vmatprep.subr.bf16.mxu0 0
    %125 = vmatpush1.bf16.msra.mxu0 %v67
    %126 = vmatprep.subr.bf16.mxu0 0
    %127 = vmatpush2.bf16.msra.mxu0 0
    %128 = vmatprep.subr.bf16.mxu0 0
    %129 = vmatpush2.bf16.msra.mxu0 0
    %130 = vmatprep.subr.bf16.mxu0 0
    %131 = vmatpush2.bf16.msra.mxu0 0
    %132 = vmatprep.subr.bf16.mxu0 0
    %133 = vmatpush2.bf16.msra.mxu0 0
    %134 = vmatprep.subr.bf16.mxu0 0
    %135 = vmatpush2.bf16.msra.mxu0 0
    %136 = vmatprep.subr.bf16.mxu0 0
    %137 = vmatpush2.bf16.msra.mxu0 0
    %138 = vmatprep.subr.bf16.mxu0 0
    %139 = vmatpush2.bf16.msra.mxu0 0
    %140 = vmatprep.subr.bf16.mxu0 0
    %141 = vmatpush2.bf16.msra.mxu0 0
    %142 = vmatprep.mubr.bf16.mxu0 0
    %143 = vmatmul.mubr.bf16.gmra.mxu0 %v57
    %v144 = vpop.f32.mrf.mxu0
    %v145 = vadd.f32 0.0, %v144
    %v146 = vpop.f32.mrf.mxu0
    %v147 = vpop.f32.mrf.mxu0
    %v148 = vpop.f32.mrf.mxu0
    %149 = vdwg.mxu0
    %v150 = vadd.f32 %v34, %v104
    %v151 = vadd.f32 %v34, %v106
    %v152 = vadd.f32 %v34, %v145
    %v153 = vld [vmem:[%s1] sm:$0xf]
    %v155 = vunpack.c.l.b16 %v153
    %v156 = vpack.c.b16 %v155, %v155
    %157 = vrot.lane.b32.xlu0 %v156, 124
    %v158 = vpop.permute.xlu0 %157
    %v159 = vcombine.high %v53, %v53
    %160 = vrot.lane.b32.xlu0 %v46, 127
    %v161 = vpop.permute.xlu0 %160
    %162 = vrot.lane.b32.xlu0 %v54, 127
    %v163 = vpop.permute.xlu0 %162
    %164 = vrot.lane.b32.xlu0 %v53, 127
    %v165 = vpop.permute.xlu0 %164
    %166 = vrot.lane.b32.xlu0 %v159, 127
    %v167 = vpop.permute.xlu0 %166
    %vm168 = vcmask 1039360
    %v169 = vsel %vm168, %v161, %v163
    %v170 = vsel %vm168, %v163, %v165
    %v171 = vsel %vm168, %v165, %v167
    %v173 = vsel %vm55, %v158, 0
    %v176 = vsel %vm59, %v169, 0
    %v179 = vsel %vm59, %v170, 0
    %v182 = vsel %vm59, %v171, 0
    %184 = vmatprep.subr.bf16.mxu0 0
    %185 = vmatpush1.bf16.msra.mxu0 0
    %186 = vmatprep.subr.bf16.mxu0 0
    %187 = vmatpush1.bf16.msra.mxu0 0
    %188 = vmatprep.subr.bf16.mxu0 0
    %189 = vmatpush1.bf16.msra.mxu0 0
    %190 = vmatprep.subr.bf16.mxu0 0
    %191 = vmatpush1.bf16.msra.mxu0 0
    %192 = vmatprep.subr.bf16.mxu0 0
    %193 = vmatpush1.bf16.msra.mxu0 0
    %194 = vmatprep.subr.bf16.mxu0 0
    %195 = vmatpush1.bf16.msra.mxu0 0
    %196 = vmatprep.subr.bf16.mxu0 0
    %197 = vmatpush1.bf16.msra.mxu0 0
    %198 = vmatprep.subr.bf16.mxu0 %v179
    %199 = vmatpush1.bf16.msra.mxu0 %v176
    %200 = vmatprep.subr.bf16.mxu0 0
    %201 = vmatpush2.bf16.msra.mxu0 0
    %202 = vmatprep.subr.bf16.mxu0 0
    %203 = vmatpush2.bf16.msra.mxu0 0
    %204 = vmatprep.subr.bf16.mxu0 0
    %205 = vmatpush2.bf16.msra.mxu0 0
    %206 = vmatprep.subr.bf16.mxu0 0
    %207 = vmatpush2.bf16.msra.mxu0 0
    %208 = vmatprep.subr.bf16.mxu0 0
    %209 = vmatpush2.bf16.msra.mxu0 0
    %210 = vmatprep.subr.bf16.mxu0 0
    %211 = vmatpush2.bf16.msra.mxu0 0
    %212 = vmatprep.subr.bf16.mxu0 0
    %213 = vmatpush2.bf16.msra.mxu0 0
    %214 = vmatprep.subr.bf16.mxu0 0
    %215 = vmatpush2.bf16.msra.mxu0 0
    %216 = vmatprep.mubr.bf16.mxu0 0
    %217 = vmatmul.mubr.bf16.gmra.mxu0 %v173
    %v218 = vpop.f32.mrf.mxu0
    %v219 = vadd.f32 0.0, %v218
    %v220 = vpop.f32.mrf.mxu0
    %v221 = vadd.f32 0.0, %v220
    %v222 = vpop.f32.mrf.mxu0
    %v223 = vpop.f32.mrf.mxu0
    %224 = vdwg.mxu0
    %225 = vmatprep.subr.bf16.mxu0 0
    %226 = vmatpush1.bf16.msra.mxu0 0
    %227 = vmatprep.subr.bf16.mxu0 0
    %228 = vmatpush1.bf16.msra.mxu0 0
    %229 = vmatprep.subr.bf16.mxu0 0
    %230 = vmatpush1.bf16.msra.mxu0 0
    %231 = vmatprep.subr.bf16.mxu0 0
    %232 = vmatpush1.bf16.msra.mxu0 0
    %233 = vmatprep.subr.bf16.mxu0 0
    %234 = vmatpush1.bf16.msra.mxu0 0
    %235 = vmatprep.subr.bf16.mxu0 0
    %236 = vmatpush1.bf16.msra.mxu0 0
    %237 = vmatprep.subr.bf16.mxu0 0
    %238 = vmatpush1.bf16.msra.mxu0 0
    %239 = vmatprep.subr.bf16.mxu0 0
    %240 = vmatpush1.bf16.msra.mxu0 %v182
    %241 = vmatprep.subr.bf16.mxu0 0
    %242 = vmatpush2.bf16.msra.mxu0 0
    %243 = vmatprep.subr.bf16.mxu0 0
    %244 = vmatpush2.bf16.msra.mxu0 0
    %245 = vmatprep.subr.bf16.mxu0 0
    %246 = vmatpush2.bf16.msra.mxu0 0
    %247 = vmatprep.subr.bf16.mxu0 0
    %248 = vmatpush2.bf16.msra.mxu0 0
    %249 = vmatprep.subr.bf16.mxu0 0
    %250 = vmatpush2.bf16.msra.mxu0 0
    %251 = vmatprep.subr.bf16.mxu0 0
    %252 = vmatpush2.bf16.msra.mxu0 0
    %253 = vmatprep.subr.bf16.mxu0 0
    %254 = vmatpush2.bf16.msra.mxu0 0
    %255 = vmatprep.subr.bf16.mxu0 0
    %256 = vmatpush2.bf16.msra.mxu0 0
    %257 = vmatprep.mubr.bf16.mxu0 0
    %258 = vmatmul.mubr.bf16.gmra.mxu0 %v173
    %v259 = vpop.f32.mrf.mxu0
    %v260 = vadd.f32 0.0, %v259
    %v261 = vpop.f32.mrf.mxu0
    %v262 = vpop.f32.mrf.mxu0
    %v263 = vpop.f32.mrf.mxu0
    %264 = vdwg.mxu0
    %v265 = vadd.f32 %v150, %v219
    %v266 = vadd.f32 %v151, %v221
    %v267 = vadd.f32 %v152, %v260
    %v268 = vld [vmem:[%s1] sm:$0xf]
    %v270 = vunpack.c.l.b16 %v268
    %v271 = vpack.c.b16 %v270, %v270
    %272 = vrot.lane.b32.xlu0 %v271, 120
    %v273 = vpop.permute.xlu0 %272
    %274 = vrot.lane.b32.xlu0 %v46, 126
    %v275 = vpop.permute.xlu0 %274
    %276 = vrot.lane.b32.xlu0 %v54, 126
    %v277 = vpop.permute.xlu0 %276
    %278 = vrot.lane.b32.xlu0 %v53, 126
    %v279 = vpop.permute.xlu0 %278
    %280 = vrot.lane.b32.xlu0 %v159, 126
    %v281 = vpop.permute.xlu0 %280
    %vm282 = vcmask 1031168
    %v283 = vsel %vm282, %v275, %v277
    %v284 = vsel %vm282, %v277, %v279
    %v285 = vsel %vm282, %v279, %v281
    %v287 = vsel %vm55, %v273, 0
    %v290 = vsel %vm59, %v283, 0
    %v293 = vsel %vm59, %v284, 0
    %v296 = vsel %vm59, %v285, 0
    %298 = vmatprep.subr.bf16.mxu0 0
    %299 = vmatpush1.bf16.msra.mxu0 0
    %300 = vmatprep.subr.bf16.mxu0 0
    %301 = vmatpush1.bf16.msra.mxu0 0
    %302 = vmatprep.subr.bf16.mxu0 0
    %303 = vmatpush1.bf16.msra.mxu0 0
    %304 = vmatprep.subr.bf16.mxu0 0
    %305 = vmatpush1.bf16.msra.mxu0 0
    %306 = vmatprep.subr.bf16.mxu0 0
    %307 = vmatpush1.bf16.msra.mxu0 0
    %308 = vmatprep.subr.bf16.mxu0 0
    %309 = vmatpush1.bf16.msra.mxu0 0
    %310 = vmatprep.subr.bf16.mxu0 0
    %311 = vmatpush1.bf16.msra.mxu0 0
    %312 = vmatprep.subr.bf16.mxu0 %v293
    %313 = vmatpush1.bf16.msra.mxu0 %v290
    %314 = vmatprep.subr.bf16.mxu0 0
    %315 = vmatpush2.bf16.msra.mxu0 0
    %316 = vmatprep.subr.bf16.mxu0 0
    %317 = vmatpush2.bf16.msra.mxu0 0
    %318 = vmatprep.subr.bf16.mxu0 0
    %319 = vmatpush2.bf16.msra.mxu0 0
    %320 = vmatprep.subr.bf16.mxu0 0
    %321 = vmatpush2.bf16.msra.mxu0 0
    %322 = vmatprep.subr.bf16.mxu0 0
    %323 = vmatpush2.bf16.msra.mxu0 0
    %324 = vmatprep.subr.bf16.mxu0 0
    %325 = vmatpush2.bf16.msra.mxu0 0
    %326 = vmatprep.subr.bf16.mxu0 0
    %327 = vmatpush2.bf16.msra.mxu0 0
    %328 = vmatprep.subr.bf16.mxu0 0
    %329 = vmatpush2.bf16.msra.mxu0 0
    %330 = vmatprep.mubr.bf16.mxu0 0
    %331 = vmatmul.mubr.bf16.gmra.mxu0 %v287
    %v332 = vpop.f32.mrf.mxu0
    %v333 = vadd.f32 0.0, %v332
    %v334 = vpop.f32.mrf.mxu0
    %v335 = vadd.f32 0.0, %v334
    %v336 = vpop.f32.mrf.mxu0
    %v337 = vpop.f32.mrf.mxu0
    %338 = vdwg.mxu0
    %339 = vmatprep.subr.bf16.mxu0 0
    %340 = vmatpush1.bf16.msra.mxu0 0
    %341 = vmatprep.subr.bf16.mxu0 0
    %342 = vmatpush1.bf16.msra.mxu0 0
    %343 = vmatprep.subr.bf16.mxu0 0
    %344 = vmatpush1.bf16.msra.mxu0 0
    %345 = vmatprep.subr.bf16.mxu0 0
    %346 = vmatpush1.bf16.msra.mxu0 0
    %347 = vmatprep.subr.bf16.mxu0 0
    %348 = vmatpush1.bf16.msra.mxu0 0
    %349 = vmatprep.subr.bf16.mxu0 0
    %350 = vmatpush1.bf16.msra.mxu0 0
    %351 = vmatprep.subr.bf16.mxu0 0
    %352 = vmatpush1.bf16.msra.mxu0 0
    %353 = vmatprep.subr.bf16.mxu0 0
    %354 = vmatpush1.bf16.msra.mxu0 %v296
    %355 = vmatprep.subr.bf16.mxu0 0
    %356 = vmatpush2.bf16.msra.mxu0 0
    %357 = vmatprep.subr.bf16.mxu0 0
    %358 = vmatpush2.bf16.msra.mxu0 0
    %359 = vmatprep.subr.bf16.mxu0 0
    %360 = vmatpush2.bf16.msra.mxu0 0
    %361 = vmatprep.subr.bf16.mxu0 0
    %362 = vmatpush2.bf16.msra.mxu0 0
    %363 = vmatprep.subr.bf16.mxu0 0
    %364 = vmatpush2.bf16.msra.mxu0 0
    %365 = vmatprep.subr.bf16.mxu0 0
    %366 = vmatpush2.bf16.msra.mxu0 0
    %367 = vmatprep.subr.bf16.mxu0 0
    %368 = vmatpush2.bf16.msra.mxu0 0
    %369 = vmatprep.subr.bf16.mxu0 0
    %370 = vmatpush2.bf16.msra.mxu0 0
    %371 = vmatprep.mubr.bf16.mxu0 0
    %372 = vmatmul.mubr.bf16.gmra.mxu0 %v287
    %v373 = vpop.f32.mrf.mxu0
    %v374 = vadd.f32 0.0, %v373
    %v375 = vpop.f32.mrf.mxu0
    %v376 = vpop.f32.mrf.mxu0
    %v377 = vpop.f32.mrf.mxu0
    %378 = vdwg.mxu0
    %v379 = vadd.f32 %v265, %v333
    %v380 = vadd.f32 %v266, %v335
    %v381 = vadd.f32 %v267, %v374
    %v382 = vld [vmem:[%s1] sm:$0xf]
    %v384 = vunpack.c.l.b16 %v382
    %v385 = vpack.c.b16 %v384, %v384
    %386 = vrot.lane.b32.xlu0 %v385, 116
    %v387 = vpop.permute.xlu0 %386
    %388 = vrot.lane.b32.xlu0 %v46, 110
    %v389 = vpop.permute.xlu0 %388
    %390 = vrot.lane.b32.xlu0 %v54, 110
    %v391 = vpop.permute.xlu0 %390
    %392 = vrot.lane.b32.xlu0 %v53, 110
    %v393 = vpop.permute.xlu0 %392
    %394 = vrot.lane.b32.xlu0 %v159, 110
    %v395 = vpop.permute.xlu0 %394
    %vm396 = vcmask 900096
    %v397 = vsel %vm396, %v389, %v391
    %v398 = vsel %vm396, %v391, %v393
    %v399 = vsel %vm396, %v393, %v395
    %v401 = vsel %vm55, %v387, 0
    %v404 = vsel %vm59, %v397, 0
    %v407 = vsel %vm59, %v398, 0
    %v410 = vsel %vm59, %v399, 0
    %412 = vmatprep.subr.bf16.mxu0 0
    %413 = vmatpush1.bf16.msra.mxu0 0
    %414 = vmatprep.subr.bf16.mxu0 0
    %415 = vmatpush1.bf16.msra.mxu0 0
    %416 = vmatprep.subr.bf16.mxu0 0
    %417 = vmatpush1.bf16.msra.mxu0 0
    %418 = vmatprep.subr.bf16.mxu0 0
    %419 = vmatpush1.bf16.msra.mxu0 0
    %420 = vmatprep.subr.bf16.mxu0 0
    %421 = vmatpush1.bf16.msra.mxu0 0
    %422 = vmatprep.subr.bf16.mxu0 0
    %423 = vmatpush1.bf16.msra.mxu0 0
    %424 = vmatprep.subr.bf16.mxu0 0
    %425 = vmatpush1.bf16.msra.mxu0 0
    %426 = vmatprep.subr.bf16.mxu0 %v407
    %427 = vmatpush1.bf16.msra.mxu0 %v404
    %428 = vmatprep.subr.bf16.mxu0 0
    %429 = vmatpush2.bf16.msra.mxu0 0
    %430 = vmatprep.subr.bf16.mxu0 0
    %431 = vmatpush2.bf16.msra.mxu0 0
    %432 = vmatprep.subr.bf16.mxu0 0
    %433 = vmatpush2.bf16.msra.mxu0 0
    %434 = vmatprep.subr.bf16.mxu0 0
    %435 = vmatpush2.bf16.msra.mxu0 0
    %436 = vmatprep.subr.bf16.mxu0 0
    %437 = vmatpush2.bf16.msra.mxu0 0
    %438 = vmatprep.subr.bf16.mxu0 0
    %439 = vmatpush2.bf16.msra.mxu0 0
    %440 = vmatprep.subr.bf16.mxu0 0
    %441 = vmatpush2.bf16.msra.mxu0 0
    %442 = vmatprep.subr.bf16.mxu0 0
    %443 = vmatpush2.bf16.msra.mxu0 0
    %444 = vmatprep.mubr.bf16.mxu0 0
    %445 = vmatmul.mubr.bf16.gmra.mxu0 %v401
    %v446 = vpop.f32.mrf.mxu0
    %v447 = vadd.f32 0.0, %v446
    %v448 = vpop.f32.mrf.mxu0
    %v449 = vadd.f32 0.0, %v448
    %v450 = vpop.f32.mrf.mxu0
    %v451 = vpop.f32.mrf.mxu0
    %452 = vdwg.mxu0
    %453 = vmatprep.subr.bf16.mxu0 0
    %454 = vmatpush1.bf16.msra.mxu0 0
    %455 = vmatprep.subr.bf16.mxu0 0
    %456 = vmatpush1.bf16.msra.mxu0 0
    %457 = vmatprep.subr.bf16.mxu0 0
    %458 = vmatpush1.bf16.msra.mxu0 0
    %459 = vmatprep.subr.bf16.mxu0 0
    %460 = vmatpush1.bf16.msra.mxu0 0
    %461 = vmatprep.subr.bf16.mxu0 0
    %462 = vmatpush1.bf16.msra.mxu0 0
    %463 = vmatprep.subr.bf16.mxu0 0
    %464 = vmatpush1.bf16.msra.mxu0 0
    %465 = vmatprep.subr.bf16.mxu0 0
    %466 = vmatpush1.bf16.msra.mxu0 0
    %467 = vmatprep.subr.bf16.mxu0 0
    %468 = vmatpush1.bf16.msra.mxu0 %v410
    %469 = vmatprep.subr.bf16.mxu0 0
    %470 = vmatpush2.bf16.msra.mxu0 0
    %471 = vmatprep.subr.bf16.mxu0 0
    %472 = vmatpush2.bf16.msra.mxu0 0
    %473 = vmatprep.subr.bf16.mxu0 0
    %474 = vmatpush2.bf16.msra.mxu0 0
    %475 = vmatprep.subr.bf16.mxu0 0
    %476 = vmatpush2.bf16.msra.mxu0 0
    %477 = vmatprep.subr.bf16.mxu0 0
    %478 = vmatpush2.bf16.msra.mxu0 0
    %479 = vmatprep.subr.bf16.mxu0 0
    %480 = vmatpush2.bf16.msra.mxu0 0
    %481 = vmatprep.subr.bf16.mxu0 0
    %482 = vmatpush2.bf16.msra.mxu0 0
    %483 = vmatprep.subr.bf16.mxu0 0
    %484 = vmatpush2.bf16.msra.mxu0 0
    %485 = vmatprep.mubr.bf16.mxu0 0
    %486 = vmatmul.mubr.bf16.gmra.mxu0 %v401
    %v487 = vpop.f32.mrf.mxu0
    %v488 = vadd.f32 0.0, %v487
    %v489 = vpop.f32.mrf.mxu0
    %v490 = vpop.f32.mrf.mxu0
    %v491 = vpop.f32.mrf.mxu0
    %492 = vdwg.mxu0
    %v493 = vadd.f32 %v379, %v447
    %v494 = vadd.f32 %v380, %v449
    %v495 = vadd.f32 %v381, %v488
    %v496 = vld [vmem:[%s1] sm:$0xf]
    %v498 = vunpack.c.l.b16 %v496
    %v499 = vpack.c.b16 %v498, %v498
    %500 = vrot.lane.b32.xlu0 %v499, 112
    %v501 = vpop.permute.xlu0 %500
    %502 = vrot.lane.b32.xlu0 %v46, 109
    %v503 = vpop.permute.xlu0 %502
    %504 = vrot.lane.b32.xlu0 %v54, 109
    %v505 = vpop.permute.xlu0 %504
    %506 = vrot.lane.b32.xlu0 %v53, 109
    %v507 = vpop.permute.xlu0 %506
    %508 = vrot.lane.b32.xlu0 %v159, 109
    %v509 = vpop.permute.xlu0 %508
    %vm510 = vcmask 891904
    %v511 = vsel %vm510, %v503, %v505
    %v512 = vsel %vm510, %v505, %v507
    %v513 = vsel %vm510, %v507, %v509
    %v515 = vsel %vm55, %v501, 0
    %v518 = vsel %vm59, %v511, 0
    %v521 = vsel %vm59, %v512, 0
    %v524 = vsel %vm59, %v513, 0
    %526 = vmatprep.subr.bf16.mxu0 0
    %527 = vmatpush1.bf16.msra.mxu0 0
    %528 = vmatprep.subr.bf16.mxu0 0
    %529 = vmatpush1.bf16.msra.mxu0 0
    %530 = vmatprep.subr.bf16.mxu0 0
    %531 = vmatpush1.bf16.msra.mxu0 0
    %532 = vmatprep.subr.bf16.mxu0 0
    %533 = vmatpush1.bf16.msra.mxu0 0
    %534 = vmatprep.subr.bf16.mxu0 0
    %535 = vmatpush1.bf16.msra.mxu0 0
    %536 = vmatprep.subr.bf16.mxu0 0
    %537 = vmatpush1.bf16.msra.mxu0 0
    %538 = vmatprep.subr.bf16.mxu0 0
    %539 = vmatpush1.bf16.msra.mxu0 0
    %540 = vmatprep.subr.bf16.mxu0 %v521
    %541 = vmatpush1.bf16.msra.mxu0 %v518
    %542 = vmatprep.subr.bf16.mxu0 0
    %543 = vmatpush2.bf16.msra.mxu0 0
    %544 = vmatprep.subr.bf16.mxu0 0
    %545 = vmatpush2.bf16.msra.mxu0 0
    %546 = vmatprep.subr.bf16.mxu0 0
    %547 = vmatpush2.bf16.msra.mxu0 0
    %548 = vmatprep.subr.bf16.mxu0 0
    %549 = vmatpush2.bf16.msra.mxu0 0
    %550 = vmatprep.subr.bf16.mxu0 0
    %551 = vmatpush2.bf16.msra.mxu0 0
    %552 = vmatprep.subr.bf16.mxu0 0
    %553 = vmatpush2.bf16.msra.mxu0 0
    %554 = vmatprep.subr.bf16.mxu0 0
    %555 = vmatpush2.bf16.msra.mxu0 0
    %556 = vmatprep.subr.bf16.mxu0 0
    %557 = vmatpush2.bf16.msra.mxu0 0
    %558 = vmatprep.mubr.bf16.mxu0 0
    %559 = vmatmul.mubr.bf16.gmra.mxu0 %v515
    %v560 = vpop.f32.mrf.mxu0
    %v561 = vadd.f32 0.0, %v560
    %v562 = vpop.f32.mrf.mxu0
    %v563 = vadd.f32 0.0, %v562
    %v564 = vpop.f32.mrf.mxu0
    %v565 = vpop.f32.mrf.mxu0
    %566 = vdwg.mxu0
    %567 = vmatprep.subr.bf16.mxu0 0
    %568 = vmatpush1.bf16.msra.mxu0 0
    %569 = vmatprep.subr.bf16.mxu0 0
    %570 = vmatpush1.bf16.msra.mxu0 0
    %571 = vmatprep.subr.bf16.mxu0 0
    %572 = vmatpush1.bf16.msra.mxu0 0
    %573 = vmatprep.subr.bf16.mxu0 0
    %574 = vmatpush1.bf16.msra.mxu0 0
    %575 = vmatprep.subr.bf16.mxu0 0
    %576 = vmatpush1.bf16.msra.mxu0 0
    %577 = vmatprep.subr.bf16.mxu0 0
    %578 = vmatpush1.bf16.msra.mxu0 0
    %579 = vmatprep.subr.bf16.mxu0 0
    %580 = vmatpush1.bf16.msra.mxu0 0
    %581 = vmatprep.subr.bf16.mxu0 0
    %582 = vmatpush1.bf16.msra.mxu0 %v524
    %583 = vmatprep.subr.bf16.mxu0 0
    %584 = vmatpush2.bf16.msra.mxu0 0
    %585 = vmatprep.subr.bf16.mxu0 0
    %586 = vmatpush2.bf16.msra.mxu0 0
    %587 = vmatprep.subr.bf16.mxu0 0
    %588 = vmatpush2.bf16.msra.mxu0 0
    %589 = vmatprep.subr.bf16.mxu0 0
    %590 = vmatpush2.bf16.msra.mxu0 0
    %591 = vmatprep.subr.bf16.mxu0 0
    %592 = vmatpush2.bf16.msra.mxu0 0
    %593 = vmatprep.subr.bf16.mxu0 0
    %594 = vmatpush2.bf16.msra.mxu0 0
    %595 = vmatprep.subr.bf16.mxu0 0
    %596 = vmatpush2.bf16.msra.mxu0 0
    %597 = vmatprep.subr.bf16.mxu0 0
    %598 = vmatpush2.bf16.msra.mxu0 0
    %599 = vmatprep.mubr.bf16.mxu0 0
    %600 = vmatmul.mubr.bf16.gmra.mxu0 %v515
    %v601 = vpop.f32.mrf.mxu0
    %v602 = vadd.f32 0.0, %v601
    %v603 = vpop.f32.mrf.mxu0
    %v604 = vpop.f32.mrf.mxu0
    %v605 = vpop.f32.mrf.mxu0
    %606 = vdwg.mxu0
    %v607 = vadd.f32 %v493, %v561
    %v608 = vadd.f32 %v494, %v563
    %v609 = vadd.f32 %v495, %v602
    %v610 = vld [vmem:[%s1] sm:$0xf]
    %v612 = vunpack.c.l.b16 %v610
    %v613 = vpack.c.b16 %v612, %v612
    %614 = vrot.lane.b32.xlu0 %v613, 108
    %v615 = vpop.permute.xlu0 %614
    %616 = vrot.lane.b32.xlu0 %v46, 108
    %v617 = vpop.permute.xlu0 %616
    %618 = vrot.lane.b32.xlu0 %v54, 108
    %v619 = vpop.permute.xlu0 %618
    %620 = vrot.lane.b32.xlu0 %v53, 108
    %v621 = vpop.permute.xlu0 %620
    %622 = vrot.lane.b32.xlu0 %v159, 108
    %v623 = vpop.permute.xlu0 %622
    %vm624 = vcmask 883712
    %v625 = vsel %vm624, %v617, %v619
    %v626 = vsel %vm624, %v619, %v621
    %v627 = vsel %vm624, %v621, %v623
    %v629 = vsel %vm55, %v615, 0
    %v632 = vsel %vm59, %v625, 0
    %v635 = vsel %vm59, %v626, 0
    %v638 = vsel %vm59, %v627, 0
    %640 = vmatprep.subr.bf16.mxu0 0
    %641 = vmatpush1.bf16.msra.mxu0 0
    %642 = vmatprep.subr.bf16.mxu0 0
    %643 = vmatpush1.bf16.msra.mxu0 0
    %644 = vmatprep.subr.bf16.mxu0 0
    %645 = vmatpush1.bf16.msra.mxu0 0
    %646 = vmatprep.subr.bf16.mxu0 0
    %647 = vmatpush1.bf16.msra.mxu0 0
    %648 = vmatprep.subr.bf16.mxu0 0
    %649 = vmatpush1.bf16.msra.mxu0 0
    %650 = vmatprep.subr.bf16.mxu0 0
    %651 = vmatpush1.bf16.msra.mxu0 0
    %652 = vmatprep.subr.bf16.mxu0 0
    %653 = vmatpush1.bf16.msra.mxu0 0
    %654 = vmatprep.subr.bf16.mxu0 %v635
    %655 = vmatpush1.bf16.msra.mxu0 %v632
    %656 = vmatprep.subr.bf16.mxu0 0
    %657 = vmatpush2.bf16.msra.mxu0 0
    %658 = vmatprep.subr.bf16.mxu0 0
    %659 = vmatpush2.bf16.msra.mxu0 0
    %660 = vmatprep.subr.bf16.mxu0 0
    %661 = vmatpush2.bf16.msra.mxu0 0
    %662 = vmatprep.subr.bf16.mxu0 0
    %663 = vmatpush2.bf16.msra.mxu0 0
    %664 = vmatprep.subr.bf16.mxu0 0
    %665 = vmatpush2.bf16.msra.mxu0 0
    %666 = vmatprep.subr.bf16.mxu0 0
    %667 = vmatpush2.bf16.msra.mxu0 0
    %668 = vmatprep.subr.bf16.mxu0 0
    %669 = vmatpush2.bf16.msra.mxu0 0
    %670 = vmatprep.subr.bf16.mxu0 0
    %671 = vmatpush2.bf16.msra.mxu0 0
    %672 = vmatprep.mubr.bf16.mxu0 0
    %673 = vmatmul.mubr.bf16.gmra.mxu0 %v629
    %v674 = vpop.f32.mrf.mxu0
    %v675 = vadd.f32 0.0, %v674
    %v676 = vpop.f32.mrf.mxu0
    %v677 = vadd.f32 0.0, %v676
    %v678 = vpop.f32.mrf.mxu0
    %v679 = vpop.f32.mrf.mxu0
    %680 = vdwg.mxu0
    %681 = vmatprep.subr.bf16.mxu0 0
    %682 = vmatpush1.bf16.msra.mxu0 0
    %683 = vmatprep.subr.bf16.mxu0 0
    %684 = vmatpush1.bf16.msra.mxu0 0
    %685 = vmatprep.subr.bf16.mxu0 0
    %686 = vmatpush1.bf16.msra.mxu0 0
    %687 = vmatprep.subr.bf16.mxu0 0
    %688 = vmatpush1.bf16.msra.mxu0 0
    %689 = vmatprep.subr.bf16.mxu0 0
    %690 = vmatpush1.bf16.msra.mxu0 0
    %691 = vmatprep.subr.bf16.mxu0 0
    %692 = vmatpush1.bf16.msra.mxu0 0
    %693 = vmatprep.subr.bf16.mxu0 0
    %694 = vmatpush1.bf16.msra.mxu0 0
    %695 = vmatprep.subr.bf16.mxu0 0
    %696 = vmatpush1.bf16.msra.mxu0 %v638
    %697 = vmatprep.subr.bf16.mxu0 0
    %698 = vmatpush2.bf16.msra.mxu0 0
    %699 = vmatprep.subr.bf16.mxu0 0
    %700 = vmatpush2.bf16.msra.mxu0 0
    %701 = vmatprep.subr.bf16.mxu0 0
    %702 = vmatpush2.bf16.msra.mxu0 0
    %703 = vmatprep.subr.bf16.mxu0 0
    %704 = vmatpush2.bf16.msra.mxu0 0
    %705 = vmatprep.subr.bf16.mxu0 0
    %706 = vmatpush2.bf16.msra.mxu0 0
    %707 = vmatprep.subr.bf16.mxu0 0
    %708 = vmatpush2.bf16.msra.mxu0 0
    %709 = vmatprep.subr.bf16.mxu0 0
    %710 = vmatpush2.bf16.msra.mxu0 0
    %711 = vmatprep.subr.bf16.mxu0 0
    %712 = vmatpush2.bf16.msra.mxu0 0
    %713 = vmatprep.mubr.bf16.mxu0 0
    %714 = vmatmul.mubr.bf16.gmra.mxu0 %v629
    %v715 = vpop.f32.mrf.mxu0
    %v716 = vadd.f32 0.0, %v715
    %v717 = vpop.f32.mrf.mxu0
    %v718 = vpop.f32.mrf.mxu0
    %v719 = vpop.f32.mrf.mxu0
    %720 = vdwg.mxu0
    %v721 = vadd.f32 %v607, %v675
    %v722 = vadd.f32 %v608, %v677
    %v723 = vadd.f32 %v609, %v716
    %v724 = vld [vmem:[%s1] sm:$0xf]
    %v726 = vunpack.c.l.b16 %v724
    %v727 = vpack.c.b16 %v726, %v726
    %728 = vrot.lane.b32.xlu0 %v727, 104
    %v729 = vpop.permute.xlu0 %728
    %730 = vrot.lane.b32.xlu0 %v46, 92
    %v731 = vpop.permute.xlu0 %730
    %732 = vrot.lane.b32.xlu0 %v54, 92
    %v733 = vpop.permute.xlu0 %732
    %734 = vrot.lane.b32.xlu0 %v53, 92
    %v735 = vpop.permute.xlu0 %734
    %736 = vrot.lane.b32.xlu0 %v159, 92
    %v737 = vpop.permute.xlu0 %736
    %vm738 = vcmask 752640
    %v739 = vsel %vm738, %v731, %v733
    %v740 = vsel %vm738, %v733, %v735
    %v741 = vsel %vm738, %v735, %v737
    %v743 = vsel %vm55, %v729, 0
    %v746 = vsel %vm59, %v739, 0
    %v749 = vsel %vm59, %v740, 0
    %v752 = vsel %vm59, %v741, 0
    %754 = vmatprep.subr.bf16.mxu0 0
    %755 = vmatpush1.bf16.msra.mxu0 0
    %756 = vmatprep.subr.bf16.mxu0 0
    %757 = vmatpush1.bf16.msra.mxu0 0
    %758 = vmatprep.subr.bf16.mxu0 0
    %759 = vmatpush1.bf16.msra.mxu0 0
    %760 = vmatprep.subr.bf16.mxu0 0
    %761 = vmatpush1.bf16.msra.mxu0 0
    %762 = vmatprep.subr.bf16.mxu0 0
    %763 = vmatpush1.bf16.msra.mxu0 0
    %764 = vmatprep.subr.bf16.mxu0 0
    %765 = vmatpush1.bf16.msra.mxu0 0
    %766 = vmatprep.subr.bf16.mxu0 0
    %767 = vmatpush1.bf16.msra.mxu0 0
    %768 = vmatprep.subr.bf16.mxu0 %v749
    %769 = vmatpush1.bf16.msra.mxu0 %v746
    %770 = vmatprep.subr.bf16.mxu0 0
    %771 = vmatpush2.bf16.msra.mxu0 0
    %772 = vmatprep.subr.bf16.mxu0 0
    %773 = vmatpush2.bf16.msra.mxu0 0
    %774 = vmatprep.subr.bf16.mxu0 0
    %775 = vmatpush2.bf16.msra.mxu0 0
    %776 = vmatprep.subr.bf16.mxu0 0
    %777 = vmatpush2.bf16.msra.mxu0 0
    %778 = vmatprep.subr.bf16.mxu0 0
    %779 = vmatpush2.bf16.msra.mxu0 0
    %780 = vmatprep.subr.bf16.mxu0 0
    %781 = vmatpush2.bf16.msra.mxu0 0
    %782 = vmatprep.subr.bf16.mxu0 0
    %783 = vmatpush2.bf16.msra.mxu0 0
    %784 = vmatprep.subr.bf16.mxu0 0
    %785 = vmatpush2.bf16.msra.mxu0 0
    %786 = vmatprep.mubr.bf16.mxu0 0
    %787 = vmatmul.mubr.bf16.gmra.mxu0 %v743
    %v788 = vpop.f32.mrf.mxu0
    %v789 = vadd.f32 0.0, %v788
    %v790 = vpop.f32.mrf.mxu0
    %v791 = vadd.f32 0.0, %v790
    %v792 = vpop.f32.mrf.mxu0
    %v793 = vpop.f32.mrf.mxu0
    %794 = vdwg.mxu0
    %795 = vmatprep.subr.bf16.mxu0 0
    %796 = vmatpush1.bf16.msra.mxu0 0
    %797 = vmatprep.subr.bf16.mxu0 0
    %798 = vmatpush1.bf16.msra.mxu0 0
    %799 = vmatprep.subr.bf16.mxu0 0
    %800 = vmatpush1.bf16.msra.mxu0 0
    %801 = vmatprep.subr.bf16.mxu0 0
    %802 = vmatpush1.bf16.msra.mxu0 0
    %803 = vmatprep.subr.bf16.mxu0 0
    %804 = vmatpush1.bf16.msra.mxu0 0
    %805 = vmatprep.subr.bf16.mxu0 0
    %806 = vmatpush1.bf16.msra.mxu0 0
    %807 = vmatprep.subr.bf16.mxu0 0
    %808 = vmatpush1.bf16.msra.mxu0 0
    %809 = vmatprep.subr.bf16.mxu0 0
    %810 = vmatpush1.bf16.msra.mxu0 %v752
    %811 = vmatprep.subr.bf16.mxu0 0
    %812 = vmatpush2.bf16.msra.mxu0 0
    %813 = vmatprep.subr.bf16.mxu0 0
    %814 = vmatpush2.bf16.msra.mxu0 0
    %815 = vmatprep.subr.bf16.mxu0 0
    %816 = vmatpush2.bf16.msra.mxu0 0
    %817 = vmatprep.subr.bf16.mxu0 0
    %818 = vmatpush2.bf16.msra.mxu0 0
    %819 = vmatprep.subr.bf16.mxu0 0
    %820 = vmatpush2.bf16.msra.mxu0 0
    %821 = vmatprep.subr.bf16.mxu0 0
    %822 = vmatpush2.bf16.msra.mxu0 0
    %823 = vmatprep.subr.bf16.mxu0 0
    %824 = vmatpush2.bf16.msra.mxu0 0
    %825 = vmatprep.subr.bf16.mxu0 0
    %826 = vmatpush2.bf16.msra.mxu0 0
    %827 = vmatprep.mubr.bf16.mxu0 0
    %828 = vmatmul.mubr.bf16.gmra.mxu0 %v743
    %v829 = vpop.f32.mrf.mxu0
    %v830 = vadd.f32 0.0, %v829
    %v831 = vpop.f32.mrf.mxu0
    %v832 = vpop.f32.mrf.mxu0
    %v833 = vpop.f32.mrf.mxu0
    %834 = vdwg.mxu0
    %v835 = vadd.f32 %v721, %v789
    %v836 = vadd.f32 %v722, %v791
    %v837 = vadd.f32 %v723, %v830
    %v838 = vld [vmem:[%s1] sm:$0xf]
    %v840 = vunpack.c.l.b16 %v838
    %v841 = vpack.c.b16 %v840, %v840
    %842 = vrot.lane.b32.xlu0 %v841, 100
    %v843 = vpop.permute.xlu0 %842
    %844 = vrot.lane.b32.xlu0 %v46, 91
    %v845 = vpop.permute.xlu0 %844
    %846 = vrot.lane.b32.xlu0 %v54, 91
    %v847 = vpop.permute.xlu0 %846
    %848 = vrot.lane.b32.xlu0 %v53, 91
    %v849 = vpop.permute.xlu0 %848
    %850 = vrot.lane.b32.xlu0 %v159, 91
    %v851 = vpop.permute.xlu0 %850
    %vm852 = vcmask 744448
    %v853 = vsel %vm852, %v845, %v847
    %v854 = vsel %vm852, %v847, %v849
    %v855 = vsel %vm852, %v849, %v851
    %v857 = vsel %vm55, %v843, 0
    %v860 = vsel %vm59, %v853, 0
    %v863 = vsel %vm59, %v854, 0
    %v866 = vsel %vm59, %v855, 0
    %868 = vmatprep.subr.bf16.mxu0 0
    %869 = vmatpush1.bf16.msra.mxu0 0
    %870 = vmatprep.subr.bf16.mxu0 0
    %871 = vmatpush1.bf16.msra.mxu0 0
    %872 = vmatprep.subr.bf16.mxu0 0
    %873 = vmatpush1.bf16.msra.mxu0 0
    %874 = vmatprep.subr.bf16.mxu0 0
    %875 = vmatpush1.bf16.msra.mxu0 0
    %876 = vmatprep.subr.bf16.mxu0 0
    %877 = vmatpush1.bf16.msra.mxu0 0
    %878 = vmatprep.subr.bf16.mxu0 0
    %879 = vmatpush1.bf16.msra.mxu0 0
    %880 = vmatprep.subr.bf16.mxu0 0
    %881 = vmatpush1.bf16.msra.mxu0 0
    %882 = vmatprep.subr.bf16.mxu0 %v863
    %883 = vmatpush1.bf16.msra.mxu0 %v860
    %884 = vmatprep.subr.bf16.mxu0 0
    %885 = vmatpush2.bf16.msra.mxu0 0
    %886 = vmatprep.subr.bf16.mxu0 0
    %887 = vmatpush2.bf16.msra.mxu0 0
    %888 = vmatprep.subr.bf16.mxu0 0
    %889 = vmatpush2.bf16.msra.mxu0 0
    %890 = vmatprep.subr.bf16.mxu0 0
    %891 = vmatpush2.bf16.msra.mxu0 0
    %892 = vmatprep.subr.bf16.mxu0 0
    %893 = vmatpush2.bf16.msra.mxu0 0
    %894 = vmatprep.subr.bf16.mxu0 0
    %895 = vmatpush2.bf16.msra.mxu0 0
    %896 = vmatprep.subr.bf16.mxu0 0
    %897 = vmatpush2.bf16.msra.mxu0 0
    %898 = vmatprep.subr.bf16.mxu0 0
    %899 = vmatpush2.bf16.msra.mxu0 0
    %900 = vmatprep.mubr.bf16.mxu0 0
    %901 = vmatmul.mubr.bf16.gmra.mxu0 %v857
    %v902 = vpop.f32.mrf.mxu0
    %v903 = vadd.f32 0.0, %v902
    %v904 = vpop.f32.mrf.mxu0
    %v905 = vadd.f32 0.0, %v904
    %v906 = vpop.f32.mrf.mxu0
    %v907 = vpop.f32.mrf.mxu0
    %908 = vdwg.mxu0
    %909 = vmatprep.subr.bf16.mxu0 0
    %910 = vmatpush1.bf16.msra.mxu0 0
    %911 = vmatprep.subr.bf16.mxu0 0
    %912 = vmatpush1.bf16.msra.mxu0 0
    %913 = vmatprep.subr.bf16.mxu0 0
    %914 = vmatpush1.bf16.msra.mxu0 0
    %915 = vmatprep.subr.bf16.mxu0 0
    %916 = vmatpush1.bf16.msra.mxu0 0
    %917 = vmatprep.subr.bf16.mxu0 0
    %918 = vmatpush1.bf16.msra.mxu0 0
    %919 = vmatprep.subr.bf16.mxu0 0
    %920 = vmatpush1.bf16.msra.mxu0 0
    %921 = vmatprep.subr.bf16.mxu0 0
    %922 = vmatpush1.bf16.msra.mxu0 0
    %923 = vmatprep.subr.bf16.mxu0 0
    %924 = vmatpush1.bf16.msra.mxu0 %v866
    %925 = vmatprep.subr.bf16.mxu0 0
    %926 = vmatpush2.bf16.msra.mxu0 0
    %927 = vmatprep.subr.bf16.mxu0 0
    %928 = vmatpush2.bf16.msra.mxu0 0
    %929 = vmatprep.subr.bf16.mxu0 0
    %930 = vmatpush2.bf16.msra.mxu0 0
    %931 = vmatprep.subr.bf16.mxu0 0
    %932 = vmatpush2.bf16.msra.mxu0 0
    %933 = vmatprep.subr.bf16.mxu0 0
    %934 = vmatpush2.bf16.msra.mxu0 0
    %935 = vmatprep.subr.bf16.mxu0 0
    %936 = vmatpush2.bf16.msra.mxu0 0
    %937 = vmatprep.subr.bf16.mxu0 0
    %938 = vmatpush2.bf16.msra.mxu0 0
    %939 = vmatprep.subr.bf16.mxu0 0
    %940 = vmatpush2.bf16.msra.mxu0 0
    %941 = vmatprep.mubr.bf16.mxu0 0
    %942 = vmatmul.mubr.bf16.gmra.mxu0 %v857
    %v943 = vpop.f32.mrf.mxu0
    %v944 = vadd.f32 0.0, %v943
    %v945 = vpop.f32.mrf.mxu0
    %v946 = vpop.f32.mrf.mxu0
    %v947 = vpop.f32.mrf.mxu0
    %948 = vdwg.mxu0
    %v949 = vadd.f32 %v835, %v903
    %v950 = vadd.f32 %v836, %v905
    %v951 = vadd.f32 %v837, %v944
    %v952 = vld [vmem:[%s1] sm:$0xf]
    %v954 = vunpack.c.l.b16 %v952
    %v955 = vpack.c.b16 %v954, %v954
    %956 = vrot.lane.b32.xlu0 %v955, 96
    %v957 = vpop.permute.xlu0 %956
    %958 = vrot.lane.b32.xlu0 %v46, 90
    %v959 = vpop.permute.xlu0 %958
    %960 = vrot.lane.b32.xlu0 %v54, 90
    %v961 = vpop.permute.xlu0 %960
    %962 = vrot.lane.b32.xlu0 %v53, 90
    %v963 = vpop.permute.xlu0 %962
    %964 = vrot.lane.b32.xlu0 %v159, 90
    %v965 = vpop.permute.xlu0 %964
    %vm966 = vcmask 736256
    %v967 = vsel %vm966, %v959, %v961
    %v968 = vsel %vm966, %v961, %v963
    %v969 = vsel %vm966, %v963, %v965
    %v971 = vsel %vm55, %v957, 0
    %v974 = vsel %vm59, %v967, 0
    %v977 = vsel %vm59, %v968, 0
    %v980 = vsel %vm59, %v969, 0
    %982 = vmatprep.subr.bf16.mxu0 0
    %983 = vmatpush1.bf16.msra.mxu0 0
    %984 = vmatprep.subr.bf16.mxu0 0
    %985 = vmatpush1.bf16.msra.mxu0 0
    %986 = vmatprep.subr.bf16.mxu0 0
    %987 = vmatpush1.bf16.msra.mxu0 0
    %988 = vmatprep.subr.bf16.mxu0 0
    %989 = vmatpush1.bf16.msra.mxu0 0
    %990 = vmatprep.subr.bf16.mxu0 0
    %991 = vmatpush1.bf16.msra.mxu0 0
    %992 = vmatprep.subr.bf16.mxu0 0
    %993 = vmatpush1.bf16.msra.mxu0 0
    %994 = vmatprep.subr.bf16.mxu0 0
    %995 = vmatpush1.bf16.msra.mxu0 0
    %996 = vmatprep.subr.bf16.mxu0 %v977
    %997 = vmatpush1.bf16.msra.mxu0 %v974
    %998 = vmatprep.subr.bf16.mxu0 0
    %999 = vmatpush2.bf16.msra.mxu0 0
    %1000 = vmatprep.subr.bf16.mxu0 0
    %1001 = vmatpush2.bf16.msra.mxu0 0
    %1002 = vmatprep.subr.bf16.mxu0 0
    %1003 = vmatpush2.bf16.msra.mxu0 0
    %1004 = vmatprep.subr.bf16.mxu0 0
    %1005 = vmatpush2.bf16.msra.mxu0 0
    %1006 = vmatprep.subr.bf16.mxu0 0
    %1007 = vmatpush2.bf16.msra.mxu0 0
    %1008 = vmatprep.subr.bf16.mxu0 0
    %1009 = vmatpush2.bf16.msra.mxu0 0
    %1010 = vmatprep.subr.bf16.mxu0 0
    %1011 = vmatpush2.bf16.msra.mxu0 0
    %1012 = vmatprep.subr.bf16.mxu0 0
    %1013 = vmatpush2.bf16.msra.mxu0 0
    %1014 = vmatprep.mubr.bf16.mxu0 0
    %1015 = vmatmul.mubr.bf16.gmra.mxu0 %v971
    %v1016 = vpop.f32.mrf.mxu0
    %v1017 = vadd.f32 0.0, %v1016
    %v1018 = vpop.f32.mrf.mxu0
    %v1019 = vadd.f32 0.0, %v1018
    %v1020 = vpop.f32.mrf.mxu0
    %v1021 = vpop.f32.mrf.mxu0
    %1022 = vdwg.mxu0
    %1023 = vmatprep.subr.bf16.mxu0 0
    %1024 = vmatpush1.bf16.msra.mxu0 0
    %1025 = vmatprep.subr.bf16.mxu0 0
    %1026 = vmatpush1.bf16.msra.mxu0 0
    %1027 = vmatprep.subr.bf16.mxu0 0
    %1028 = vmatpush1.bf16.msra.mxu0 0
    %1029 = vmatprep.subr.bf16.mxu0 0
    %1030 = vmatpush1.bf16.msra.mxu0 0
    %1031 = vmatprep.subr.bf16.mxu0 0
    %1032 = vmatpush1.bf16.msra.mxu0 0
    %1033 = vmatprep.subr.bf16.mxu0 0
    %1034 = vmatpush1.bf16.msra.mxu0 0
    %1035 = vmatprep.subr.bf16.mxu0 0
    %1036 = vmatpush1.bf16.msra.mxu0 0
    %1037 = vmatprep.subr.bf16.mxu0 0
    %1038 = vmatpush1.bf16.msra.mxu0 %v980
    %1039 = vmatprep.subr.bf16.mxu0 0
    %1040 = vmatpush2.bf16.msra.mxu0 0
    %1041 = vmatprep.subr.bf16.mxu0 0
    %1042 = vmatpush2.bf16.msra.mxu0 0
    %1043 = vmatprep.subr.bf16.mxu0 0
    %1044 = vmatpush2.bf16.msra.mxu0 0
    %1045 = vmatprep.subr.bf16.mxu0 0
    %1046 = vmatpush2.bf16.msra.mxu0 0
    %1047 = vmatprep.subr.bf16.mxu0 0
    %1048 = vmatpush2.bf16.msra.mxu0 0
    %1049 = vmatprep.subr.bf16.mxu0 0
    %1050 = vmatpush2.bf16.msra.mxu0 0
    %1051 = vmatprep.subr.bf16.mxu0 0
    %1052 = vmatpush2.bf16.msra.mxu0 0
    %1053 = vmatprep.subr.bf16.mxu0 0
    %1054 = vmatpush2.bf16.msra.mxu0 0
    %1055 = vmatprep.mubr.bf16.mxu0 0
    %1056 = vmatmul.mubr.bf16.gmra.mxu0 %v971
    %v1057 = vpop.f32.mrf.mxu0
    %v1058 = vadd.f32 0.0, %v1057
    %v1059 = vpop.f32.mrf.mxu0
    %v1060 = vpop.f32.mrf.mxu0
    %v1061 = vpop.f32.mrf.mxu0
    %1062 = vdwg.mxu0
    %v1063 = vadd.f32 %v949, %v1017
    %v1064 = vadd.f32 %v950, %v1019
    %v1065 = vadd.f32 %v951, %v1058
    %v1066 = vmax.f32 %v1063, 0.0
    %v1067 = vmax.f32 %v1064, 0.0
    %v1068 = vmax.f32 %v1065, 0.0
    %1069 = vst [vmem:[#allocation5] sm:$0xff] %v1066
    %1070 = vst [vmem:[#allocation5 + $0x8] sm:$0xff] %v1067
    %1071 = vst [vmem:[#allocation5 + $0x10] sm:$0xff] %v1068
    %s1072 = scalar_lea.vmem [#allocation2], 8
    %v1073 = vld [vmem:[%s1072] sm:$0xff]
    %v1074 = vld [vmem:[%s1] sm:$0xf]
    %v1076 = vcombine.high %v1073, %v1073
    %v1078 = vunpack.c.l.s4 1983009808
    %v1079 = vunpack.c.0.s8 %v1078
    %v1080 = vlaneseq
    %v1081 = vshrl.u32 %v1080, 7
    %v1082 = vsub.s32 %v1079, %v1081
    %v1083 = vrot.slane %v1073, %v1082
    %v1085 = vunpack.c.l.s4 1983009808
    %v1086 = vunpack.c.0.s8 %v1085
    %v1087 = vlaneseq
    %v1088 = vshrl.u32 %v1087, 7
    %v1089 = vsub.s32 %v1086, %v1088
    %v1090 = vrot.slane %v1076, %v1089
    %v1091 = vcombine.high %v1083, %v1083
    %v1093 = vsel %vm55, %v1074, 0
    %v1096 = vsel %vm59, %v1083, 0
    %v1099 = vsel %vm59, %v1091, 0
    %v1102 = vsel %vm59, %v1090, 0
    %1104 = vmatprep.subr.bf16.mxu0 0
    %1105 = vmatpush1.bf16.msra.mxu0 0
    %1106 = vmatprep.subr.bf16.mxu0 0
    %1107 = vmatpush1.bf16.msra.mxu0 0
    %1108 = vmatprep.subr.bf16.mxu0 0
    %1109 = vmatpush1.bf16.msra.mxu0 0
    %1110 = vmatprep.subr.bf16.mxu0 0
    %1111 = vmatpush1.bf16.msra.mxu0 0
    %1112 = vmatprep.subr.bf16.mxu0 0
    %1113 = vmatpush1.bf16.msra.mxu0 0
    %1114 = vmatprep.subr.bf16.mxu0 0
    %1115 = vmatpush1.bf16.msra.mxu0 0
    %1116 = vmatprep.subr.bf16.mxu0 0
    %1117 = vmatpush1.bf16.msra.mxu0 0
    %1118 = vmatprep.subr.bf16.mxu0 %v1099
    %1119 = vmatpush1.bf16.msra.mxu0 %v1096
    %1120 = vmatprep.subr.bf16.mxu0 0
    %1121 = vmatpush2.bf16.msra.mxu0 0
    %1122 = vmatprep.subr.bf16.mxu0 0
    %1123 = vmatpush2.bf16.msra.mxu0 0
    %1124 = vmatprep.subr.bf16.mxu0 0
    %1125 = vmatpush2.bf16.msra.mxu0 0
    %1126 = vmatprep.subr.bf16.mxu0 0
    %1127 = vmatpush2.bf16.msra.mxu0 0
    %1128 = vmatprep.subr.bf16.mxu0 0
    %1129 = vmatpush2.bf16.msra.mxu0 0
    %1130 = vmatprep.subr.bf16.mxu0 0
    %1131 = vmatpush2.bf16.msra.mxu0 0
    %1132 = vmatprep.subr.bf16.mxu0 0
    %1133 = vmatpush2.bf16.msra.mxu0 0
    %1134 = vmatprep.subr.bf16.mxu0 0
    %1135 = vmatpush2.bf16.msra.mxu0 0
    %1136 = vmatprep.mubr.bf16.mxu0 0
    %1137 = vmatmul.mubr.bf16.gmra.mxu0 %v1093
    %v1138 = vpop.f32.mrf.mxu0
    %v1139 = vadd.f32 0.0, %v1138
    %v1140 = vpop.f32.mrf.mxu0
    %v1141 = vadd.f32 0.0, %v1140
    %v1142 = vpop.f32.mrf.mxu0
    %v1143 = vpop.f32.mrf.mxu0
    %1144 = vdwg.mxu0
    %1145 = vmatprep.subr.bf16.mxu0 0
    %1146 = vmatpush1.bf16.msra.mxu0 0
    %1147 = vmatprep.subr.bf16.mxu0 0
    %1148 = vmatpush1.bf16.msra.mxu0 0
    %1149 = vmatprep.subr.bf16.mxu0 0
    %1150 = vmatpush1.bf16.msra.mxu0 0
    %1151 = vmatprep.subr.bf16.mxu0 0
    %1152 = vmatpush1.bf16.msra.mxu0 0
    %1153 = vmatprep.subr.bf16.mxu0 0
    %1154 = vmatpush1.bf16.msra.mxu0 0
    %1155 = vmatprep.subr.bf16.mxu0 0
    %1156 = vmatpush1.bf16.msra.mxu0 0
    %1157 = vmatprep.subr.bf16.mxu0 0
    %1158 = vmatpush1.bf16.msra.mxu0 0
    %1159 = vmatprep.subr.bf16.mxu0 0
    %1160 = vmatpush1.bf16.msra.mxu0 %v1102
    %1161 = vmatprep.subr.bf16.mxu0 0
    %1162 = vmatpush2.bf16.msra.mxu0 0
    %1163 = vmatprep.subr.bf16.mxu0 0
    %1164 = vmatpush2.bf16.msra.mxu0 0
    %1165 = vmatprep.subr.bf16.mxu0 0
    %1166 = vmatpush2.bf16.msra.mxu0 0
    %1167 = vmatprep.subr.bf16.mxu0 0
    %1168 = vmatpush2.bf16.msra.mxu0 0
    %1169 = vmatprep.subr.bf16.mxu0 0
    %1170 = vmatpush2.bf16.msra.mxu0 0
    %1171 = vmatprep.subr.bf16.mxu0 0
    %1172 = vmatpush2.bf16.msra.mxu0 0
    %1173 = vmatprep.subr.bf16.mxu0 0
    %1174 = vmatpush2.bf16.msra.mxu0 0
    %1175 = vmatprep.subr.bf16.mxu0 0
    %1176 = vmatpush2.bf16.msra.mxu0 0
    %1177 = vmatprep.mubr.bf16.mxu0 0
    %1178 = vmatmul.mubr.bf16.gmra.mxu0 %v1093
    %v1179 = vpop.f32.mrf.mxu0
    %v1180 = vadd.f32 0.0, %v1179
    %v1181 = vpop.f32.mrf.mxu0
    %v1182 = vpop.f32.mrf.mxu0
    %v1183 = vpop.f32.mrf.mxu0
    %1184 = vdwg.mxu0
    %v1185 = vadd.f32 %v34, %v1139
    %v1186 = vadd.f32 %v34, %v1141
    %v1187 = vadd.f32 %v34, %v1180
    %v1188 = vld [vmem:[%s1] sm:$0xf]
    %v1190 = vunpack.c.l.b16 %v1188
    %v1191 = vpack.c.b16 %v1190, %v1190
    %1192 = vrot.lane.b32.xlu0 %v1191, 124
    %v1193 = vpop.permute.xlu0 %1192
    %v1194 = vcombine.high %v1090, %v1090
    %1195 = vrot.lane.b32.xlu0 %v1083, 127
    %v1196 = vpop.permute.xlu0 %1195
    %1197 = vrot.lane.b32.xlu0 %v1091, 127
    %v1198 = vpop.permute.xlu0 %1197
    %1199 = vrot.lane.b32.xlu0 %v1090, 127
    %v1200 = vpop.permute.xlu0 %1199
    %1201 = vrot.lane.b32.xlu0 %v1194, 127
    %v1202 = vpop.permute.xlu0 %1201
    %v1203 = vsel %vm168, %v1196, %v1198
    %v1204 = vsel %vm168, %v1198, %v1200
    %v1205 = vsel %vm168, %v1200, %v1202
    %v1207 = vsel %vm55, %v1193, 0
    %v1210 = vsel %vm59, %v1203, 0
    %v1213 = vsel %vm59, %v1204, 0
    %v1216 = vsel %vm59, %v1205, 0
    %1218 = vmatprep.subr.bf16.mxu0 0
    %1219 = vmatpush1.bf16.msra.mxu0 0
    %1220 = vmatprep.subr.bf16.mxu0 0
    %1221 = vmatpush1.bf16.msra.mxu0 0
    %1222 = vmatprep.subr.bf16.mxu0 0
    %1223 = vmatpush1.bf16.msra.mxu0 0
    %1224 = vmatprep.subr.bf16.mxu0 0
    %1225 = vmatpush1.bf16.msra.mxu0 0
    %1226 = vmatprep.subr.bf16.mxu0 0
    %1227 = vmatpush1.bf16.msra.mxu0 0
    %1228 = vmatprep.subr.bf16.mxu0 0
    %1229 = vmatpush1.bf16.msra.mxu0 0
    %1230 = vmatprep.subr.bf16.mxu0 0
    %1231 = vmatpush1.bf16.msra.mxu0 0
    %1232 = vmatprep.subr.bf16.mxu0 %v1213
    %1233 = vmatpush1.bf16.msra.mxu0 %v1210
    %1234 = vmatprep.subr.bf16.mxu0 0
    %1235 = vmatpush2.bf16.msra.mxu0 0
    %1236 = vmatprep.subr.bf16.mxu0 0
    %1237 = vmatpush2.bf16.msra.mxu0 0
    %1238 = vmatprep.subr.bf16.mxu0 0
    %1239 = vmatpush2.bf16.msra.mxu0 0
    %1240 = vmatprep.subr.bf16.mxu0 0
    %1241 = vmatpush2.bf16.msra.mxu0 0
    %1242 = vmatprep.subr.bf16.mxu0 0
    %1243 = vmatpush2.bf16.msra.mxu0 0
    %1244 = vmatprep.subr.bf16.mxu0 0
    %1245 = vmatpush2.bf16.msra.mxu0 0
    %1246 = vmatprep.subr.bf16.mxu0 0
    %1247 = vmatpush2.bf16.msra.mxu0 0
    %1248 = vmatprep.subr.bf16.mxu0 0
    %1249 = vmatpush2.bf16.msra.mxu0 0
    %1250 = vmatprep.mubr.bf16.mxu0 0
    %1251 = vmatmul.mubr.bf16.gmra.mxu0 %v1207
    %v1252 = vpop.f32.mrf.mxu0
    %v1253 = vadd.f32 0.0, %v1252
    %v1254 = vpop.f32.mrf.mxu0
    %v1255 = vadd.f32 0.0, %v1254
    %v1256 = vpop.f32.mrf.mxu0
    %v1257 = vpop.f32.mrf.mxu0
    %1258 = vdwg.mxu0
    %1259 = vmatprep.subr.bf16.mxu0 0
    %1260 = vmatpush1.bf16.msra.mxu0 0
    %1261 = vmatprep.subr.bf16.mxu0 0
    %1262 = vmatpush1.bf16.msra.mxu0 0
    %1263 = vmatprep.subr.bf16.mxu0 0
    %1264 = vmatpush1.bf16.msra.mxu0 0
    %1265 = vmatprep.subr.bf16.mxu0 0
    %1266 = vmatpush1.bf16.msra.mxu0 0
    %1267 = vmatprep.subr.bf16.mxu0 0
    %1268 = vmatpush1.bf16.msra.mxu0 0
    %1269 = vmatprep.subr.bf16.mxu0 0
    %1270 = vmatpush1.bf16.msra.mxu0 0
    %1271 = vmatprep.subr.bf16.mxu0 0
    %1272 = vmatpush1.bf16.msra.mxu0 0
    %1273 = vmatprep.subr.bf16.mxu0 0
    %1274 = vmatpush1.bf16.msra.mxu0 %v1216
    %1275 = vmatprep.subr.bf16.mxu0 0
    %1276 = vmatpush2.bf16.msra.mxu0 0
    %1277 = vmatprep.subr.bf16.mxu0 0
    %1278 = vmatpush2.bf16.msra.mxu0 0
    %1279 = vmatprep.subr.bf16.mxu0 0
    %1280 = vmatpush2.bf16.msra.mxu0 0
    %1281 = vmatprep.subr.bf16.mxu0 0
    %1282 = vmatpush2.bf16.msra.mxu0 0
    %1283 = vmatprep.subr.bf16.mxu0 0
    %1284 = vmatpush2.bf16.msra.mxu0 0
    %1285 = vmatprep.subr.bf16.mxu0 0
    %1286 = vmatpush2.bf16.msra.mxu0 0
    %1287 = vmatprep.subr.bf16.mxu0 0
    %1288 = vmatpush2.bf16.msra.mxu0 0
    %1289 = vmatprep.subr.bf16.mxu0 0
    %1290 = vmatpush2.bf16.msra.mxu0 0
    %1291 = vmatprep.mubr.bf16.mxu0 0
    %1292 = vmatmul.mubr.bf16.gmra.mxu0 %v1207
    %v1293 = vpop.f32.mrf.mxu0
    %v1294 = vadd.f32 0.0, %v1293
    %v1295 = vpop.f32.mrf.mxu0
    %v1296 = vpop.f32.mrf.mxu0
    %v1297 = vpop.f32.mrf.mxu0
    %1298 = vdwg.mxu0
    %v1299 = vadd.f32 %v1185, %v1253
    %v1300 = vadd.f32 %v1186, %v1255
    %v1301 = vadd.f32 %v1187, %v1294
    %v1302 = vld [vmem:[%s1] sm:$0xf]
    %v1304 = vunpack.c.l.b16 %v1302
    %v1305 = vpack.c.b16 %v1304, %v1304
    %1306 = vrot.lane.b32.xlu0 %v1305, 120
    %v1307 = vpop.permute.xlu0 %1306
    %1308 = vrot.lane.b32.xlu0 %v1083, 126
    %v1309 = vpop.permute.xlu0 %1308
    %1310 = vrot.lane.b32.xlu0 %v1091, 126
    %v1311 = vpop.permute.xlu0 %1310
    %1312 = vrot.lane.b32.xlu0 %v1090, 126
    %v1313 = vpop.permute.xlu0 %1312
    %1314 = vrot.lane.b32.xlu0 %v1194, 126
    %v1315 = vpop.permute.xlu0 %1314
    %v1316 = vsel %vm282, %v1309, %v1311
    %v1317 = vsel %vm282, %v1311, %v1313
    %v1318 = vsel %vm282, %v1313, %v1315
    %v1320 = vsel %vm55, %v1307, 0
    %v1323 = vsel %vm59, %v1316, 0
    %v1326 = vsel %vm59, %v1317, 0
    %v1329 = vsel %vm59, %v1318, 0
    %1331 = vmatprep.subr.bf16.mxu0 0
    %1332 = vmatpush1.bf16.msra.mxu0 0
    %1333 = vmatprep.subr.bf16.mxu0 0
    %1334 = vmatpush1.bf16.msra.mxu0 0
    %1335 = vmatprep.subr.bf16.mxu0 0
    %1336 = vmatpush1.bf16.msra.mxu0 0
    %1337 = vmatprep.subr.bf16.mxu0 0
    %1338 = vmatpush1.bf16.msra.mxu0 0
    %1339 = vmatprep.subr.bf16.mxu0 0
    %1340 = vmatpush1.bf16.msra.mxu0 0
    %1341 = vmatprep.subr.bf16.mxu0 0
    %1342 = vmatpush1.bf16.msra.mxu0 0
    %1343 = vmatprep.subr.bf16.mxu0 0
    %1344 = vmatpush1.bf16.msra.mxu0 0
    %1345 = vmatprep.subr.bf16.mxu0 %v1326
    %1346 = vmatpush1.bf16.msra.mxu0 %v1323
    %1347 = vmatprep.subr.bf16.mxu0 0
    %1348 = vmatpush2.bf16.msra.mxu0 0
    %1349 = vmatprep.subr.bf16.mxu0 0
    %1350 = vmatpush2.bf16.msra.mxu0 0
    %1351 = vmatprep.subr.bf16.mxu0 0
    %1352 = vmatpush2.bf16.msra.mxu0 0
    %1353 = vmatprep.subr.bf16.mxu0 0
    %1354 = vmatpush2.bf16.msra.mxu0 0
    %1355 = vmatprep.subr.bf16.mxu0 0
    %1356 = vmatpush2.bf16.msra.mxu0 0
    %1357 = vmatprep.subr.bf16.mxu0 0
    %1358 = vmatpush2.bf16.msra.mxu0 0
    %1359 = vmatprep.subr.bf16.mxu0 0
    %1360 = vmatpush2.bf16.msra.mxu0 0
    %1361 = vmatprep.subr.bf16.mxu0 0
    %1362 = vmatpush2.bf16.msra.mxu0 0
    %1363 = vmatprep.mubr.bf16.mxu0 0
    %1364 = vmatmul.mubr.bf16.gmra.mxu0 %v1320
    %v1365 = vpop.f32.mrf.mxu0
    %v1366 = vadd.f32 0.0, %v1365
    %v1367 = vpop.f32.mrf.mxu0
    %v1368 = vadd.f32 0.0, %v1367
    %v1369 = vpop.f32.mrf.mxu0
    %v1370 = vpop.f32.mrf.mxu0
    %1371 = vdwg.mxu0
    %1372 = vmatprep.subr.bf16.mxu0 0
    %1373 = vmatpush1.bf16.msra.mxu0 0
    %1374 = vmatprep.subr.bf16.mxu0 0
    %1375 = vmatpush1.bf16.msra.mxu0 0
    %1376 = vmatprep.subr.bf16.mxu0 0
    %1377 = vmatpush1.bf16.msra.mxu0 0
    %1378 = vmatprep.subr.bf16.mxu0 0
    %1379 = vmatpush1.bf16.msra.mxu0 0
    %1380 = vmatprep.subr.bf16.mxu0 0
    %1381 = vmatpush1.bf16.msra.mxu0 0
    %1382 = vmatprep.subr.bf16.mxu0 0
    %1383 = vmatpush1.bf16.msra.mxu0 0
    %1384 = vmatprep.subr.bf16.mxu0 0
    %1385 = vmatpush1.bf16.msra.mxu0 0
    %1386 = vmatprep.subr.bf16.mxu0 0
    %1387 = vmatpush1.bf16.msra.mxu0 %v1329
    %1388 = vmatprep.subr.bf16.mxu0 0
    %1389 = vmatpush2.bf16.msra.mxu0 0
    %1390 = vmatprep.subr.bf16.mxu0 0
    %1391 = vmatpush2.bf16.msra.mxu0 0
    %1392 = vmatprep.subr.bf16.mxu0 0
    %1393 = vmatpush2.bf16.msra.mxu0 0
    %1394 = vmatprep.subr.bf16.mxu0 0
    %1395 = vmatpush2.bf16.msra.mxu0 0
    %1396 = vmatprep.subr.bf16.mxu0 0
    %1397 = vmatpush2.bf16.msra.mxu0 0
    %1398 = vmatprep.subr.bf16.mxu0 0
    %1399 = vmatpush2.bf16.msra.mxu0 0
    %1400 = vmatprep.subr.bf16.mxu0 0
    %1401 = vmatpush2.bf16.msra.mxu0 0
    %1402 = vmatprep.subr.bf16.mxu0 0
    %1403 = vmatpush2.bf16.msra.mxu0 0
    %1404 = vmatprep.mubr.bf16.mxu0 0
    %1405 = vmatmul.mubr.bf16.gmra.mxu0 %v1320
    %v1406 = vpop.f32.mrf.mxu0
    %v1407 = vadd.f32 0.0, %v1406
    %v1408 = vpop.f32.mrf.mxu0
    %v1409 = vpop.f32.mrf.mxu0
    %v1410 = vpop.f32.mrf.mxu0
    %1411 = vdwg.mxu0
    %v1412 = vadd.f32 %v1299, %v1366
    %v1413 = vadd.f32 %v1300, %v1368
    %v1414 = vadd.f32 %v1301, %v1407
    %v1415 = vld [vmem:[%s1] sm:$0xf]
    %v1417 = vunpack.c.l.b16 %v1415
    %v1418 = vpack.c.b16 %v1417, %v1417
    %1419 = vrot.lane.b32.xlu0 %v1418, 116
    %v1420 = vpop.permute.xlu0 %1419
    %1421 = vrot.lane.b32.xlu0 %v1083, 110
    %v1422 = vpop.permute.xlu0 %1421
    %1423 = vrot.lane.b32.xlu0 %v1091, 110
    %v1424 = vpop.permute.xlu0 %1423
    %1425 = vrot.lane.b32.xlu0 %v1090, 110
    %v1426 = vpop.permute.xlu0 %1425
    %1427 = vrot.lane.b32.xlu0 %v1194, 110
    %v1428 = vpop.permute.xlu0 %1427
    %v1429 = vsel %vm396, %v1422, %v1424
    %v1430 = vsel %vm396, %v1424, %v1426
    %v1431 = vsel %vm396, %v1426, %v1428
    %v1433 = vsel %vm55, %v1420, 0
    %v1436 = vsel %vm59, %v1429, 0
    %v1439 = vsel %vm59, %v1430, 0
    %v1442 = vsel %vm59, %v1431, 0
    %1444 = vmatprep.subr.bf16.mxu0 0
    %1445 = vmatpush1.bf16.msra.mxu0 0
    %1446 = vmatprep.subr.bf16.mxu0 0
    %1447 = vmatpush1.bf16.msra.mxu0 0
    %1448 = vmatprep.subr.bf16.mxu0 0
    %1449 = vmatpush1.bf16.msra.mxu0 0
    %1450 = vmatprep.subr.bf16.mxu0 0
    %1451 = vmatpush1.bf16.msra.mxu0 0
    %1452 = vmatprep.subr.bf16.mxu0 0
    %1453 = vmatpush1.bf16.msra.mxu0 0
    %1454 = vmatprep.subr.bf16.mxu0 0
    %1455 = vmatpush1.bf16.msra.mxu0 0
    %1456 = vmatprep.subr.bf16.mxu0 0
    %1457 = vmatpush1.bf16.msra.mxu0 0
    %1458 = vmatprep.subr.bf16.mxu0 %v1439
    %1459 = vmatpush1.bf16.msra.mxu0 %v1436
    %1460 = vmatprep.subr.bf16.mxu0 0
    %1461 = vmatpush2.bf16.msra.mxu0 0
    %1462 = vmatprep.subr.bf16.mxu0 0
    %1463 = vmatpush2.bf16.msra.mxu0 0
    %1464 = vmatprep.subr.bf16.mxu0 0
    %1465 = vmatpush2.bf16.msra.mxu0 0
    %1466 = vmatprep.subr.bf16.mxu0 0
    %1467 = vmatpush2.bf16.msra.mxu0 0
    %1468 = vmatprep.subr.bf16.mxu0 0
    %1469 = vmatpush2.bf16.msra.mxu0 0
    %1470 = vmatprep.subr.bf16.mxu0 0
    %1471 = vmatpush2.bf16.msra.mxu0 0
    %1472 = vmatprep.subr.bf16.mxu0 0
    %1473 = vmatpush2.bf16.msra.mxu0 0
    %1474 = vmatprep.subr.bf16.mxu0 0
    %1475 = vmatpush2.bf16.msra.mxu0 0
    %1476 = vmatprep.mubr.bf16.mxu0 0
    %1477 = vmatmul.mubr.bf16.gmra.mxu0 %v1433
    %v1478 = vpop.f32.mrf.mxu0
    %v1479 = vadd.f32 0.0, %v1478
    %v1480 = vpop.f32.mrf.mxu0
    %v1481 = vadd.f32 0.0, %v1480
    %v1482 = vpop.f32.mrf.mxu0
    %v1483 = vpop.f32.mrf.mxu0
    %1484 = vdwg.mxu0
    %1485 = vmatprep.subr.bf16.mxu0 0
    %1486 = vmatpush1.bf16.msra.mxu0 0
    %1487 = vmatprep.subr.bf16.mxu0 0
    %1488 = vmatpush1.bf16.msra.mxu0 0
    %1489 = vmatprep.subr.bf16.mxu0 0
    %1490 = vmatpush1.bf16.msra.mxu0 0
    %1491 = vmatprep.subr.bf16.mxu0 0
    %1492 = vmatpush1.bf16.msra.mxu0 0
    %1493 = vmatprep.subr.bf16.mxu0 0
    %1494 = vmatpush1.bf16.msra.mxu0 0
    %1495 = vmatprep.subr.bf16.mxu0 0
    %1496 = vmatpush1.bf16.msra.mxu0 0
    %1497 = vmatprep.subr.bf16.mxu0 0
    %1498 = vmatpush1.bf16.msra.mxu0 0
    %1499 = vmatprep.subr.bf16.mxu0 0
    %1500 = vmatpush1.bf16.msra.mxu0 %v1442
    %1501 = vmatprep.subr.bf16.mxu0 0
    %1502 = vmatpush2.bf16.msra.mxu0 0
    %1503 = vmatprep.subr.bf16.mxu0 0
    %1504 = vmatpush2.bf16.msra.mxu0 0
    %1505 = vmatprep.subr.bf16.mxu0 0
    %1506 = vmatpush2.bf16.msra.mxu0 0
    %1507 = vmatprep.subr.bf16.mxu0 0
    %1508 = vmatpush2.bf16.msra.mxu0 0
    %1509 = vmatprep.subr.bf16.mxu0 0
    %1510 = vmatpush2.bf16.msra.mxu0 0
    %1511 = vmatprep.subr.bf16.mxu0 0
    %1512 = vmatpush2.bf16.msra.mxu0 0
    %1513 = vmatprep.subr.bf16.mxu0 0
    %1514 = vmatpush2.bf16.msra.mxu0 0
    %1515 = vmatprep.subr.bf16.mxu0 0
    %1516 = vmatpush2.bf16.msra.mxu0 0
    %1517 = vmatprep.mubr.bf16.mxu0 0
    %1518 = vmatmul.mubr.bf16.gmra.mxu0 %v1433
    %v1519 = vpop.f32.mrf.mxu0
    %v1520 = vadd.f32 0.0, %v1519
    %v1521 = vpop.f32.mrf.mxu0
    %v1522 = vpop.f32.mrf.mxu0
    %v1523 = vpop.f32.mrf.mxu0
    %1524 = vdwg.mxu0
    %v1525 = vadd.f32 %v1412, %v1479
    %v1526 = vadd.f32 %v1413, %v1481
    %v1527 = vadd.f32 %v1414, %v1520
    %v1528 = vld [vmem:[%s1] sm:$0xf]
    %v1530 = vunpack.c.l.b16 %v1528
    %v1531 = vpack.c.b16 %v1530, %v1530
    %1532 = vrot.lane.b32.xlu0 %v1531, 112
    %v1533 = vpop.permute.xlu0 %1532
    %1534 = vrot.lane.b32.xlu0 %v1083, 109
    %v1535 = vpop.permute.xlu0 %1534
    %1536 = vrot.lane.b32.xlu0 %v1091, 109
    %v1537 = vpop.permute.xlu0 %1536
    %1538 = vrot.lane.b32.xlu0 %v1090, 109
    %v1539 = vpop.permute.xlu0 %1538
    %1540 = vrot.lane.b32.xlu0 %v1194, 109
    %v1541 = vpop.permute.xlu0 %1540
    %v1542 = vsel %vm510, %v1535, %v1537
    %v1543 = vsel %vm510, %v1537, %v1539
    %v1544 = vsel %vm510, %v1539, %v1541
    %v1546 = vsel %vm55, %v1533, 0
    %v1549 = vsel %vm59, %v1542, 0
    %v1552 = vsel %vm59, %v1543, 0
    %v1555 = vsel %vm59, %v1544, 0
    %1557 = vmatprep.subr.bf16.mxu0 0
    %1558 = vmatpush1.bf16.msra.mxu0 0
    %1559 = vmatprep.subr.bf16.mxu0 0
    %1560 = vmatpush1.bf16.msra.mxu0 0
    %1561 = vmatprep.subr.bf16.mxu0 0
    %1562 = vmatpush1.bf16.msra.mxu0 0
    %1563 = vmatprep.subr.bf16.mxu0 0
    %1564 = vmatpush1.bf16.msra.mxu0 0
    %1565 = vmatprep.subr.bf16.mxu0 0
    %1566 = vmatpush1.bf16.msra.mxu0 0
    %1567 = vmatprep.subr.bf16.mxu0 0
    %1568 = vmatpush1.bf16.msra.mxu0 0
    %1569 = vmatprep.subr.bf16.mxu0 0
    %1570 = vmatpush1.bf16.msra.mxu0 0
    %1571 = vmatprep.subr.bf16.mxu0 %v1552
    %1572 = vmatpush1.bf16.msra.mxu0 %v1549
    %1573 = vmatprep.subr.bf16.mxu0 0
    %1574 = vmatpush2.bf16.msra.mxu0 0
    %1575 = vmatprep.subr.bf16.mxu0 0
    %1576 = vmatpush2.bf16.msra.mxu0 0
    %1577 = vmatprep.subr.bf16.mxu0 0
    %1578 = vmatpush2.bf16.msra.mxu0 0
    %1579 = vmatprep.subr.bf16.mxu0 0
    %1580 = vmatpush2.bf16.msra.mxu0 0
    %1581 = vmatprep.subr.bf16.mxu0 0
    %1582 = vmatpush2.bf16.msra.mxu0 0
    %1583 = vmatprep.subr.bf16.mxu0 0
    %1584 = vmatpush2.bf16.msra.mxu0 0
    %1585 = vmatprep.subr.bf16.mxu0 0
    %1586 = vmatpush2.bf16.msra.mxu0 0
    %1587 = vmatprep.subr.bf16.mxu0 0
    %1588 = vmatpush2.bf16.msra.mxu0 0
    %1589 = vmatprep.mubr.bf16.mxu0 0
    %1590 = vmatmul.mubr.bf16.gmra.mxu0 %v1546
    %v1591 = vpop.f32.mrf.mxu0
    %v1592 = vadd.f32 0.0, %v1591
    %v1593 = vpop.f32.mrf.mxu0
    %v1594 = vadd.f32 0.0, %v1593
    %v1595 = vpop.f32.mrf.mxu0
    %v1596 = vpop.f32.mrf.mxu0
    %1597 = vdwg.mxu0
    %1598 = vmatprep.subr.bf16.mxu0 0
    %1599 = vmatpush1.bf16.msra.mxu0 0
    %1600 = vmatprep.subr.bf16.mxu0 0
    %1601 = vmatpush1.bf16.msra.mxu0 0
    %1602 = vmatprep.subr.bf16.mxu0 0
    %1603 = vmatpush1.bf16.msra.mxu0 0
    %1604 = vmatprep.subr.bf16.mxu0 0
    %1605 = vmatpush1.bf16.msra.mxu0 0
    %1606 = vmatprep.subr.bf16.mxu0 0
    %1607 = vmatpush1.bf16.msra.mxu0 0
    %1608 = vmatprep.subr.bf16.mxu0 0
    %1609 = vmatpush1.bf16.msra.mxu0 0
    %1610 = vmatprep.subr.bf16.mxu0 0
    %1611 = vmatpush1.bf16.msra.mxu0 0
    %1612 = vmatprep.subr.bf16.mxu0 0
    %1613 = vmatpush1.bf16.msra.mxu0 %v1555
    %1614 = vmatprep.subr.bf16.mxu0 0
    %1615 = vmatpush2.bf16.msra.mxu0 0
    %1616 = vmatprep.subr.bf16.mxu0 0
    %1617 = vmatpush2.bf16.msra.mxu0 0
    %1618 = vmatprep.subr.bf16.mxu0 0
    %1619 = vmatpush2.bf16.msra.mxu0 0
    %1620 = vmatprep.subr.bf16.mxu0 0
    %1621 = vmatpush2.bf16.msra.mxu0 0
    %1622 = vmatprep.subr.bf16.mxu0 0
    %1623 = vmatpush2.bf16.msra.mxu0 0
    %1624 = vmatprep.subr.bf16.mxu0 0
    %1625 = vmatpush2.bf16.msra.mxu0 0
    %1626 = vmatprep.subr.bf16.mxu0 0
    %1627 = vmatpush2.bf16.msra.mxu0 0
    %1628 = vmatprep.subr.bf16.mxu0 0
    %1629 = vmatpush2.bf16.msra.mxu0 0
    %1630 = vmatprep.mubr.bf16.mxu0 0
    %1631 = vmatmul.mubr.bf16.gmra.mxu0 %v1546
    %v1632 = vpop.f32.mrf.mxu0
    %v1633 = vadd.f32 0.0, %v1632
    %v1634 = vpop.f32.mrf.mxu0
    %v1635 = vpop.f32.mrf.mxu0
    %v1636 = vpop.f32.mrf.mxu0
    %1637 = vdwg.mxu0
    %v1638 = vadd.f32 %v1525, %v1592
    %v1639 = vadd.f32 %v1526, %v1594
    %v1640 = vadd.f32 %v1527, %v1633
    %v1641 = vld [vmem:[%s1] sm:$0xf]
    %v1643 = vunpack.c.l.b16 %v1641
    %v1644 = vpack.c.b16 %v1643, %v1643
    %1645 = vrot.lane.b32.xlu0 %v1644, 108
    %v1646 = vpop.permute.xlu0 %1645
    %1647 = vrot.lane.b32.xlu0 %v1083, 108
    %v1648 = vpop.permute.xlu0 %1647
    %1649 = vrot.lane.b32.xlu0 %v1091, 108
    %v1650 = vpop.permute.xlu0 %1649
    %1651 = vrot.lane.b32.xlu0 %v1090, 108
    %v1652 = vpop.permute.xlu0 %1651
    %1653 = vrot.lane.b32.xlu0 %v1194, 108
    %v1654 = vpop.permute.xlu0 %1653
    %v1655 = vsel %vm624, %v1648, %v1650
    %v1656 = vsel %vm624, %v1650, %v1652
    %v1657 = vsel %vm624, %v1652, %v1654
    %v1659 = vsel %vm55, %v1646, 0
    %v1662 = vsel %vm59, %v1655, 0
    %v1665 = vsel %vm59, %v1656, 0
    %v1668 = vsel %vm59, %v1657, 0
    %1670 = vmatprep.subr.bf16.mxu0 0
    %1671 = vmatpush1.bf16.msra.mxu0 0
    %1672 = vmatprep.subr.bf16.mxu0 0
    %1673 = vmatpush1.bf16.msra.mxu0 0
    %1674 = vmatprep.subr.bf16.mxu0 0
    %1675 = vmatpush1.bf16.msra.mxu0 0
    %1676 = vmatprep.subr.bf16.mxu0 0
    %1677 = vmatpush1.bf16.msra.mxu0 0
    %1678 = vmatprep.subr.bf16.mxu0 0
    %1679 = vmatpush1.bf16.msra.mxu0 0
    %1680 = vmatprep.subr.bf16.mxu0 0
    %1681 = vmatpush1.bf16.msra.mxu0 0
    %1682 = vmatprep.subr.bf16.mxu0 0
    %1683 = vmatpush1.bf16.msra.mxu0 0
    %1684 = vmatprep.subr.bf16.mxu0 %v1665
    %1685 = vmatpush1.bf16.msra.mxu0 %v1662
    %1686 = vmatprep.subr.bf16.mxu0 0
    %1687 = vmatpush2.bf16.msra.mxu0 0
    %1688 = vmatprep.subr.bf16.mxu0 0
    %1689 = vmatpush2.bf16.msra.mxu0 0
    %1690 = vmatprep.subr.bf16.mxu0 0
    %1691 = vmatpush2.bf16.msra.mxu0 0
    %1692 = vmatprep.subr.bf16.mxu0 0
    %1693 = vmatpush2.bf16.msra.mxu0 0
    %1694 = vmatprep.subr.bf16.mxu0 0
    %1695 = vmatpush2.bf16.msra.mxu0 0
    %1696 = vmatprep.subr.bf16.mxu0 0
    %1697 = vmatpush2.bf16.msra.mxu0 0
    %1698 = vmatprep.subr.bf16.mxu0 0
    %1699 = vmatpush2.bf16.msra.mxu0 0
    %1700 = vmatprep.subr.bf16.mxu0 0
    %1701 = vmatpush2.bf16.msra.mxu0 0
    %1702 = vmatprep.mubr.bf16.mxu0 0
    %1703 = vmatmul.mubr.bf16.gmra.mxu0 %v1659
    %v1704 = vpop.f32.mrf.mxu0
    %v1705 = vadd.f32 0.0, %v1704
    %v1706 = vpop.f32.mrf.mxu0
    %v1707 = vadd.f32 0.0, %v1706
    %v1708 = vpop.f32.mrf.mxu0
    %v1709 = vpop.f32.mrf.mxu0
    %1710 = vdwg.mxu0
    %1711 = vmatprep.subr.bf16.mxu0 0
    %1712 = vmatpush1.bf16.msra.mxu0 0
    %1713 = vmatprep.subr.bf16.mxu0 0
    %1714 = vmatpush1.bf16.msra.mxu0 0
    %1715 = vmatprep.subr.bf16.mxu0 0
    %1716 = vmatpush1.bf16.msra.mxu0 0
    %1717 = vmatprep.subr.bf16.mxu0 0
    %1718 = vmatpush1.bf16.msra.mxu0 0
    %1719 = vmatprep.subr.bf16.mxu0 0
    %1720 = vmatpush1.bf16.msra.mxu0 0
    %1721 = vmatprep.subr.bf16.mxu0 0
    %1722 = vmatpush1.bf16.msra.mxu0 0
    %1723 = vmatprep.subr.bf16.mxu0 0
    %1724 = vmatpush1.bf16.msra.mxu0 0
    %1725 = vmatprep.subr.bf16.mxu0 0
    %1726 = vmatpush1.bf16.msra.mxu0 %v1668
    %1727 = vmatprep.subr.bf16.mxu0 0
    %1728 = vmatpush2.bf16.msra.mxu0 0
    %1729 = vmatprep.subr.bf16.mxu0 0
    %1730 = vmatpush2.bf16.msra.mxu0 0
    %1731 = vmatprep.subr.bf16.mxu0 0
    %1732 = vmatpush2.bf16.msra.mxu0 0
    %1733 = vmatprep.subr.bf16.mxu0 0
    %1734 = vmatpush2.bf16.msra.mxu0 0
    %1735 = vmatprep.subr.bf16.mxu0 0
    %1736 = vmatpush2.bf16.msra.mxu0 0
    %1737 = vmatprep.subr.bf16.mxu0 0
    %1738 = vmatpush2.bf16.msra.mxu0 0
    %1739 = vmatprep.subr.bf16.mxu0 0
    %1740 = vmatpush2.bf16.msra.mxu0 0
    %1741 = vmatprep.subr.bf16.mxu0 0
    %1742 = vmatpush2.bf16.msra.mxu0 0
    %1743 = vmatprep.mubr.bf16.mxu0 0
    %1744 = vmatmul.mubr.bf16.gmra.mxu0 %v1659
    %v1745 = vpop.f32.mrf.mxu0
    %v1746 = vadd.f32 0.0, %v1745
    %v1747 = vpop.f32.mrf.mxu0
    %v1748 = vpop.f32.mrf.mxu0
    %v1749 = vpop.f32.mrf.mxu0
    %1750 = vdwg.mxu0
    %v1751 = vadd.f32 %v1638, %v1705
    %v1752 = vadd.f32 %v1639, %v1707
    %v1753 = vadd.f32 %v1640, %v1746
    %v1754 = vld [vmem:[%s1] sm:$0xf]
    %v1756 = vunpack.c.l.b16 %v1754
    %v1757 = vpack.c.b16 %v1756, %v1756
    %1758 = vrot.lane.b32.xlu0 %v1757, 104
    %v1759 = vpop.permute.xlu0 %1758
    %1760 = vrot.lane.b32.xlu0 %v1083, 92
    %v1761 = vpop.permute.xlu0 %1760
    %1762 = vrot.lane.b32.xlu0 %v1091, 92
    %v1763 = vpop.permute.xlu0 %1762
    %1764 = vrot.lane.b32.xlu0 %v1090, 92
    %v1765 = vpop.permute.xlu0 %1764
    %1766 = vrot.lane.b32.xlu0 %v1194, 92
    %v1767 = vpop.permute.xlu0 %1766
    %v1768 = vsel %vm738, %v1761, %v1763
    %v1769 = vsel %vm738, %v1763, %v1765
    %v1770 = vsel %vm738, %v1765, %v1767
    %v1772 = vsel %vm55, %v1759, 0
    %v1775 = vsel %vm59, %v1768, 0
    %v1778 = vsel %vm59, %v1769, 0
    %v1781 = vsel %vm59, %v1770, 0
    %1783 = vmatprep.subr.bf16.mxu0 0
    %1784 = vmatpush1.bf16.msra.mxu0 0
    %1785 = vmatprep.subr.bf16.mxu0 0
    %1786 = vmatpush1.bf16.msra.mxu0 0
    %1787 = vmatprep.subr.bf16.mxu0 0
    %1788 = vmatpush1.bf16.msra.mxu0 0
    %1789 = vmatprep.subr.bf16.mxu0 0
    %1790 = vmatpush1.bf16.msra.mxu0 0
    %1791 = vmatprep.subr.bf16.mxu0 0
    %1792 = vmatpush1.bf16.msra.mxu0 0
    %1793 = vmatprep.subr.bf16.mxu0 0
    %1794 = vmatpush1.bf16.msra.mxu0 0
    %1795 = vmatprep.subr.bf16.mxu0 0
    %1796 = vmatpush1.bf16.msra.mxu0 0
    %1797 = vmatprep.subr.bf16.mxu0 %v1778
    %1798 = vmatpush1.bf16.msra.mxu0 %v1775
    %1799 = vmatprep.subr.bf16.mxu0 0
    %1800 = vmatpush2.bf16.msra.mxu0 0
    %1801 = vmatprep.subr.bf16.mxu0 0
    %1802 = vmatpush2.bf16.msra.mxu0 0
    %1803 = vmatprep.subr.bf16.mxu0 0
    %1804 = vmatpush2.bf16.msra.mxu0 0
    %1805 = vmatprep.subr.bf16.mxu0 0
    %1806 = vmatpush2.bf16.msra.mxu0 0
    %1807 = vmatprep.subr.bf16.mxu0 0
    %1808 = vmatpush2.bf16.msra.mxu0 0
    %1809 = vmatprep.subr.bf16.mxu0 0
    %1810 = vmatpush2.bf16.msra.mxu0 0
    %1811 = vmatprep.subr.bf16.mxu0 0
    %1812 = vmatpush2.bf16.msra.mxu0 0
    %1813 = vmatprep.subr.bf16.mxu0 0
    %1814 = vmatpush2.bf16.msra.mxu0 0
    %1815 = vmatprep.mubr.bf16.mxu0 0
    %1816 = vmatmul.mubr.bf16.gmra.mxu0 %v1772
    %v1817 = vpop.f32.mrf.mxu0
    %v1818 = vadd.f32 0.0, %v1817
    %v1819 = vpop.f32.mrf.mxu0
    %v1820 = vadd.f32 0.0, %v1819
    %v1821 = vpop.f32.mrf.mxu0
    %v1822 = vpop.f32.mrf.mxu0
    %1823 = vdwg.mxu0
    %1824 = vmatprep.subr.bf16.mxu0 0
    %1825 = vmatpush1.bf16.msra.mxu0 0
    %1826 = vmatprep.subr.bf16.mxu0 0
    %1827 = vmatpush1.bf16.msra.mxu0 0
    %1828 = vmatprep.subr.bf16.mxu0 0
    %1829 = vmatpush1.bf16.msra.mxu0 0
    %1830 = vmatprep.subr.bf16.mxu0 0
    %1831 = vmatpush1.bf16.msra.mxu0 0
    %1832 = vmatprep.subr.bf16.mxu0 0
    %1833 = vmatpush1.bf16.msra.mxu0 0
    %1834 = vmatprep.subr.bf16.mxu0 0
    %1835 = vmatpush1.bf16.msra.mxu0 0
    %1836 = vmatprep.subr.bf16.mxu0 0
    %1837 = vmatpush1.bf16.msra.mxu0 0
    %1838 = vmatprep.subr.bf16.mxu0 0
    %1839 = vmatpush1.bf16.msra.mxu0 %v1781
    %1840 = vmatprep.subr.bf16.mxu0 0
    %1841 = vmatpush2.bf16.msra.mxu0 0
    %1842 = vmatprep.subr.bf16.mxu0 0
    %1843 = vmatpush2.bf16.msra.mxu0 0
    %1844 = vmatprep.subr.bf16.mxu0 0
    %1845 = vmatpush2.bf16.msra.mxu0 0
    %1846 = vmatprep.subr.bf16.mxu0 0
    %1847 = vmatpush2.bf16.msra.mxu0 0
    %1848 = vmatprep.subr.bf16.mxu0 0
    %1849 = vmatpush2.bf16.msra.mxu0 0
    %1850 = vmatprep.subr.bf16.mxu0 0
    %1851 = vmatpush2.bf16.msra.mxu0 0
    %1852 = vmatprep.subr.bf16.mxu0 0
    %1853 = vmatpush2.bf16.msra.mxu0 0
    %1854 = vmatprep.subr.bf16.mxu0 0
    %1855 = vmatpush2.bf16.msra.mxu0 0
    %1856 = vmatprep.mubr.bf16.mxu0 0
    %1857 = vmatmul.mubr.bf16.gmra.mxu0 %v1772
    %v1858 = vpop.f32.mrf.mxu0
    %v1859 = vadd.f32 0.0, %v1858
    %v1860 = vpop.f32.mrf.mxu0
    %v1861 = vpop.f32.mrf.mxu0
    %v1862 = vpop.f32.mrf.mxu0
    %1863 = vdwg.mxu0
    %v1864 = vadd.f32 %v1751, %v1818
    %v1865 = vadd.f32 %v1752, %v1820
    %v1866 = vadd.f32 %v1753, %v1859
    %v1867 = vld [vmem:[%s1] sm:$0xf]
    %v1869 = vunpack.c.l.b16 %v1867
    %v1870 = vpack.c.b16 %v1869, %v1869
    %1871 = vrot.lane.b32.xlu0 %v1870, 100
    %v1872 = vpop.permute.xlu0 %1871
    %1873 = vrot.lane.b32.xlu0 %v1083, 91
    %v1874 = vpop.permute.xlu0 %1873
    %1875 = vrot.lane.b32.xlu0 %v1091, 91
    %v1876 = vpop.permute.xlu0 %1875
    %1877 = vrot.lane.b32.xlu0 %v1090, 91
    %v1878 = vpop.permute.xlu0 %1877
    %1879 = vrot.lane.b32.xlu0 %v1194, 91
    %v1880 = vpop.permute.xlu0 %1879
    %v1881 = vsel %vm852, %v1874, %v1876
    %v1882 = vsel %vm852, %v1876, %v1878
    %v1883 = vsel %vm852, %v1878, %v1880
    %v1885 = vsel %vm55, %v1872, 0
    %v1888 = vsel %vm59, %v1881, 0
    %v1891 = vsel %vm59, %v1882, 0
    %v1894 = vsel %vm59, %v1883, 0
    %1896 = vmatprep.subr.bf16.mxu0 0
    %1897 = vmatpush1.bf16.msra.mxu0 0
    %1898 = vmatprep.subr.bf16.mxu0 0
    %1899 = vmatpush1.bf16.msra.mxu0 0
    %1900 = vmatprep.subr.bf16.mxu0 0
    %1901 = vmatpush1.bf16.msra.mxu0 0
    %1902 = vmatprep.subr.bf16.mxu0 0
    %1903 = vmatpush1.bf16.msra.mxu0 0
    %1904 = vmatprep.subr.bf16.mxu0 0
    %1905 = vmatpush1.bf16.msra.mxu0 0
    %1906 = vmatprep.subr.bf16.mxu0 0
    %1907 = vmatpush1.bf16.msra.mxu0 0
    %1908 = vmatprep.subr.bf16.mxu0 0
    %1909 = vmatpush1.bf16.msra.mxu0 0
    %1910 = vmatprep.subr.bf16.mxu0 %v1891
    %1911 = vmatpush1.bf16.msra.mxu0 %v1888
    %1912 = vmatprep.subr.bf16.mxu0 0
    %1913 = vmatpush2.bf16.msra.mxu0 0
    %1914 = vmatprep.subr.bf16.mxu0 0
    %1915 = vmatpush2.bf16.msra.mxu0 0
    %1916 = vmatprep.subr.bf16.mxu0 0
    %1917 = vmatpush2.bf16.msra.mxu0 0
    %1918 = vmatprep.subr.bf16.mxu0 0
    %1919 = vmatpush2.bf16.msra.mxu0 0
    %1920 = vmatprep.subr.bf16.mxu0 0
    %1921 = vmatpush2.bf16.msra.mxu0 0
    %1922 = vmatprep.subr.bf16.mxu0 0
    %1923 = vmatpush2.bf16.msra.mxu0 0
    %1924 = vmatprep.subr.bf16.mxu0 0
    %1925 = vmatpush2.bf16.msra.mxu0 0
    %1926 = vmatprep.subr.bf16.mxu0 0
    %1927 = vmatpush2.bf16.msra.mxu0 0
    %1928 = vmatprep.mubr.bf16.mxu0 0
    %1929 = vmatmul.mubr.bf16.gmra.mxu0 %v1885
    %v1930 = vpop.f32.mrf.mxu0
    %v1931 = vadd.f32 0.0, %v1930
    %v1932 = vpop.f32.mrf.mxu0
    %v1933 = vadd.f32 0.0, %v1932
    %v1934 = vpop.f32.mrf.mxu0
    %v1935 = vpop.f32.mrf.mxu0
    %1936 = vdwg.mxu0
    %1937 = vmatprep.subr.bf16.mxu0 0
    %1938 = vmatpush1.bf16.msra.mxu0 0
    %1939 = vmatprep.subr.bf16.mxu0 0
    %1940 = vmatpush1.bf16.msra.mxu0 0
    %1941 = vmatprep.subr.bf16.mxu0 0
    %1942 = vmatpush1.bf16.msra.mxu0 0
    %1943 = vmatprep.subr.bf16.mxu0 0
    %1944 = vmatpush1.bf16.msra.mxu0 0
    %1945 = vmatprep.subr.bf16.mxu0 0
    %1946 = vmatpush1.bf16.msra.mxu0 0
    %1947 = vmatprep.subr.bf16.mxu0 0
    %1948 = vmatpush1.bf16.msra.mxu0 0
    %1949 = vmatprep.subr.bf16.mxu0 0
    %1950 = vmatpush1.bf16.msra.mxu0 0
    %1951 = vmatprep.subr.bf16.mxu0 0
    %1952 = vmatpush1.bf16.msra.mxu0 %v1894
    %1953 = vmatprep.subr.bf16.mxu0 0
    %1954 = vmatpush2.bf16.msra.mxu0 0
    %1955 = vmatprep.subr.bf16.mxu0 0
    %1956 = vmatpush2.bf16.msra.mxu0 0
    %1957 = vmatprep.subr.bf16.mxu0 0
    %1958 = vmatpush2.bf16.msra.mxu0 0
    %1959 = vmatprep.subr.bf16.mxu0 0
    %1960 = vmatpush2.bf16.msra.mxu0 0
    %1961 = vmatprep.subr.bf16.mxu0 0
    %1962 = vmatpush2.bf16.msra.mxu0 0
    %1963 = vmatprep.subr.bf16.mxu0 0
    %1964 = vmatpush2.bf16.msra.mxu0 0
    %1965 = vmatprep.subr.bf16.mxu0 0
    %1966 = vmatpush2.bf16.msra.mxu0 0
    %1967 = vmatprep.subr.bf16.mxu0 0
    %1968 = vmatpush2.bf16.msra.mxu0 0
    %1969 = vmatprep.mubr.bf16.mxu0 0
    %1970 = vmatmul.mubr.bf16.gmra.mxu0 %v1885
    %v1971 = vpop.f32.mrf.mxu0
    %v1972 = vadd.f32 0.0, %v1971
    %v1973 = vpop.f32.mrf.mxu0
    %v1974 = vpop.f32.mrf.mxu0
    %v1975 = vpop.f32.mrf.mxu0
    %1976 = vdwg.mxu0
    %v1977 = vadd.f32 %v1864, %v1931
    %v1978 = vadd.f32 %v1865, %v1933
    %v1979 = vadd.f32 %v1866, %v1972
    %v1980 = vld [vmem:[%s1] sm:$0xf]
    %v1982 = vunpack.c.l.b16 %v1980
    %v1983 = vpack.c.b16 %v1982, %v1982
    %1984 = vrot.lane.b32.xlu0 %v1983, 96
    %v1985 = vpop.permute.xlu0 %1984
    %1986 = vrot.lane.b32.xlu0 %v1083, 90
    %v1987 = vpop.permute.xlu0 %1986
    %1988 = vrot.lane.b32.xlu0 %v1091, 90
    %v1989 = vpop.permute.xlu0 %1988
    %1990 = vrot.lane.b32.xlu0 %v1090, 90
    %v1991 = vpop.permute.xlu0 %1990
    %1992 = vrot.lane.b32.xlu0 %v1194, 90
    %v1993 = vpop.permute.xlu0 %1992
    %v1994 = vsel %vm966, %v1987, %v1989
    %v1995 = vsel %vm966, %v1989, %v1991
    %v1996 = vsel %vm966, %v1991, %v1993
    %v1998 = vsel %vm55, %v1985, 0
    %v2001 = vsel %vm59, %v1994, 0
    %v2004 = vsel %vm59, %v1995, 0
    %v2007 = vsel %vm59, %v1996, 0
    %2009 = vmatprep.subr.bf16.mxu0 0
    %2010 = vmatpush1.bf16.msra.mxu0 0
    %2011 = vmatprep.subr.bf16.mxu0 0
    %2012 = vmatpush1.bf16.msra.mxu0 0
    %2013 = vmatprep.subr.bf16.mxu0 0
    %2014 = vmatpush1.bf16.msra.mxu0 0
    %2015 = vmatprep.subr.bf16.mxu0 0
    %2016 = vmatpush1.bf16.msra.mxu0 0
    %2017 = vmatprep.subr.bf16.mxu0 0
    %2018 = vmatpush1.bf16.msra.mxu0 0
    %2019 = vmatprep.subr.bf16.mxu0 0
    %2020 = vmatpush1.bf16.msra.mxu0 0
    %2021 = vmatprep.subr.bf16.mxu0 0
    %2022 = vmatpush1.bf16.msra.mxu0 0
    %2023 = vmatprep.subr.bf16.mxu0 %v2004
    %2024 = vmatpush1.bf16.msra.mxu0 %v2001
    %2025 = vmatprep.subr.bf16.mxu0 0
    %2026 = vmatpush2.bf16.msra.mxu0 0
    %2027 = vmatprep.subr.bf16.mxu0 0
    %2028 = vmatpush2.bf16.msra.mxu0 0
    %2029 = vmatprep.subr.bf16.mxu0 0
    %2030 = vmatpush2.bf16.msra.mxu0 0
    %2031 = vmatprep.subr.bf16.mxu0 0
    %2032 = vmatpush2.bf16.msra.mxu0 0
    %2033 = vmatprep.subr.bf16.mxu0 0
    %2034 = vmatpush2.bf16.msra.mxu0 0
    %2035 = vmatprep.subr.bf16.mxu0 0
    %2036 = vmatpush2.bf16.msra.mxu0 0
    %2037 = vmatprep.subr.bf16.mxu0 0
    %2038 = vmatpush2.bf16.msra.mxu0 0
    %2039 = vmatprep.subr.bf16.mxu0 0
    %2040 = vmatpush2.bf16.msra.mxu0 0
    %2041 = vmatprep.mubr.bf16.mxu0 0
    %2042 = vmatmul.mubr.bf16.gmra.mxu0 %v1998
    %v2043 = vpop.f32.mrf.mxu0
    %v2044 = vadd.f32 0.0, %v2043
    %v2045 = vpop.f32.mrf.mxu0
    %v2046 = vadd.f32 0.0, %v2045
    %v2047 = vpop.f32.mrf.mxu0
    %v2048 = vpop.f32.mrf.mxu0
    %2049 = vdwg.mxu0
    %2050 = vmatprep.subr.bf16.mxu0 0
    %2051 = vmatpush1.bf16.msra.mxu0 0
    %2052 = vmatprep.subr.bf16.mxu0 0
    %2053 = vmatpush1.bf16.msra.mxu0 0
    %2054 = vmatprep.subr.bf16.mxu0 0
    %2055 = vmatpush1.bf16.msra.mxu0 0
    %2056 = vmatprep.subr.bf16.mxu0 0
    %2057 = vmatpush1.bf16.msra.mxu0 0
    %2058 = vmatprep.subr.bf16.mxu0 0
    %2059 = vmatpush1.bf16.msra.mxu0 0
    %2060 = vmatprep.subr.bf16.mxu0 0
    %2061 = vmatpush1.bf16.msra.mxu0 0
    %2062 = vmatprep.subr.bf16.mxu0 0
    %2063 = vmatpush1.bf16.msra.mxu0 0
    %2064 = vmatprep.subr.bf16.mxu0 0
    %2065 = vmatpush1.bf16.msra.mxu0 %v2007
    %2066 = vmatprep.subr.bf16.mxu0 0
    %2067 = vmatpush2.bf16.msra.mxu0 0
    %2068 = vmatprep.subr.bf16.mxu0 0
    %2069 = vmatpush2.bf16.msra.mxu0 0
    %2070 = vmatprep.subr.bf16.mxu0 0
    %2071 = vmatpush2.bf16.msra.mxu0 0
    %2072 = vmatprep.subr.bf16.mxu0 0
    %2073 = vmatpush2.bf16.msra.mxu0 0
    %2074 = vmatprep.subr.bf16.mxu0 0
    %2075 = vmatpush2.bf16.msra.mxu0 0
    %2076 = vmatprep.subr.bf16.mxu0 0
    %2077 = vmatpush2.bf16.msra.mxu0 0
    %2078 = vmatprep.subr.bf16.mxu0 0
    %2079 = vmatpush2.bf16.msra.mxu0 0
    %2080 = vmatprep.subr.bf16.mxu0 0
    %2081 = vmatpush2.bf16.msra.mxu0 0
    %2082 = vmatprep.mubr.bf16.mxu0 0
    %2083 = vmatmul.mubr.bf16.gmra.mxu0 %v1998
    %v2084 = vpop.f32.mrf.mxu0
    %v2085 = vadd.f32 0.0, %v2084
    %v2086 = vpop.f32.mrf.mxu0
    %v2087 = vpop.f32.mrf.mxu0
    %v2088 = vpop.f32.mrf.mxu0
    %2089 = vdwg.mxu0
    %v2090 = vadd.f32 %v1977, %v2044
    %v2091 = vadd.f32 %v1978, %v2046
    %v2092 = vadd.f32 %v1979, %v2085
    %v2093 = vmax.f32 %v2090, 0.0
    %v2094 = vmax.f32 %v2091, 0.0
    %v2095 = vmax.f32 %v2092, 0.0
    %s2096 = scalar_lea.vmem [#allocation5], 24
    %2097 = vst [vmem:[%s2096] sm:$0xff] %v2093
    %2098 = vst [vmem:[%s2096 + $0x8] sm:$0xff] %v2094
    %2099 = vst [vmem:[%s2096 + $0x10] sm:$0xff] %v2095
    // Predicated region
    $region18: #{tpu_custom_call.1} parent=1 // pred_check
      _
    $region19: #{tpu_custom_call.1} parent=1 // pred_check_branch
      %2101 = sbr.rel (0) target = $region21
    $region20: #{tpu_custom_call.1} parent=1 // pred_region
      %s2103 = ssub.s32 768, 768
      %2104 = vsyncadd [#allocation4], %s2103
      %s2105 = sshll.u32 [#allocation5], 4
      %s2106 = int_to_ptr.vmem [resolvable:$true] %s2105
      %2111 = dma.vmem_to_hbm [thread:$0]  %s2106, 768, %s3, [#allocation4], 384, 384, 24
    $region21: #{tpu_custom_call.1} parent=1 // pred_fallthru
      _
    // Predicated region
    $region22: #{tpu_custom_call.1} parent=1 // pred_check
      _
    $region23: #{tpu_custom_call.1} parent=1 // pred_check_branch
      %2113 = sbr.rel (0) target = $region25
    $region24: #{tpu_custom_call.1} parent=1 // pred_region
      %2114 = dma.done [#allocation4], 768
    $region25: #{tpu_custom_call.1} parent=1 // pred_fallthru
      _
    %2115 = vsyncpa [#allocation3], 1
    %2116 = vsyncpa [#allocation4], 1

</llo_original>
